<compile_context>
chip_gen: v6e
topology: v6e:2x2x1
jax: 0.10.0
libtpu: 0.0.40
codegen_flags: <defaults>
</compile_context>

<pallas_src>
import functools
import math

import jax
import jax.numpy as jnp
from jax.experimental import pallas as pl
from jax.experimental.pallas import tpu as pltpu


def _round_up(x, m):
    return (x + m - 1) // m * m


def _modconv_kernel(dlat_ref, x_ref, noise_ref, wconv_ref, wmod_ref, bmod_ref,
                    bias_ref, nstr_ref, o_ref, xcol_ref, *,
                    K, W, TH, WIN, lin_scale, conv_scale):
    KK = K * K
    pad = K // 2
    TW = TH * W
    kc, coutp = wconv_ref.shape
    cin = kc // KK

    # --- style modulation: EqualizedLinear(dlatent) as a per-(tap, in-channel) column ---
    # wmod_ref is the linear weight transposed and tiled KK times -> (KK*Cin, D).
    style = jnp.sum(wmod_ref[...] * dlat_ref[0], axis=1, keepdims=True)      # (KK*Cin, 1)
    style = style * lin_scale + bmod_ref[...]

    # --- weight-side modulation + demodulation (instead of modulating activations) ---
    wm = wconv_ref[...] * style                                              # (KK*Cin, Coutp)
    ssq = jnp.sum(wm * wm, axis=0, keepdims=True)                            # (1, Coutp)
    demod = jax.lax.rsqrt(ssq * (conv_scale * conv_scale) + 1e-8)
    w_eff = (wm * (conv_scale * demod)).astype(jnp.bfloat16)                 # (KK*Cin, Coutp)

    # --- gather the K*K taps for this row tile into a (TW, KK*Cin) VMEM column block ---
    h = pl.program_id(1)
    win_start = pl.multiple_of(h * TW, TW)
    win = x_ref[0, pl.ds(win_start, WIN), :].astype(jnp.float32)             # (WIN, Cin)
    col = jax.lax.broadcasted_iota(jnp.int32, (TW, 1), 0) % W                # output column id
    for kh in range(K):
        for kw in range(K):
            dw = kw - pad
            t = kh * K + kw
            off = pad + kh * W + dw                                          # static offset
            tap = win[off:off + TW, :]                                       # (TW, Cin)
            if dw < 0:                                                       # left width border
                tap = jnp.where(col >= -dw, tap, 0.0)
            elif dw > 0:                                                     # right width border
                tap = jnp.where(col < W - dw, tap, 0.0)
            xcol_ref[:, t * cin:(t + 1) * cin] = tap
    x_mat = xcol_ref[...].astype(jnp.bfloat16)                               # (TW, KK*Cin)

    # --- single MXU matmul + noise injection + fused leaky relu (bias, 0.2, sqrt(2)) ---
    acc = jnp.dot(x_mat, w_eff, preferred_element_type=jnp.float32)          # (TW, Coutp)
    out = acc + nstr_ref[0] * noise_ref[0]                                   # + (TW, 1) noise
    out = out + bias_ref[...]                                                # + (1, Coutp)
    out = jnp.where(out >= 0.0, out, 0.2 * out) * math.sqrt(2.0)
    o_ref[0] = out.astype(o_ref.dtype)


def mod_conv_layer(x_nchw, dlatents, noise_nchw, params, *, kernel):
    """ModConvLayer.forward.  x_nchw: (B,Cin,H,W), dlatents: (B,D), noise: (B,1,H,W)."""
    wbase = params["w_conv"]          # (K*K, Cin, Cout)
    wlin = params["w_mod"]            # (D, Cin)
    bmod = params["b_mod"]            # (Cin,)
    bias = params["bias"]             # (Cout,)
    nstr = params["noise_strength"]   # (1,)

    B, Cin, H, W = x_nchw.shape
    K = kernel
    D = dlatents.shape[-1]
    Cout = wbase.shape[-1]
    KK, HW, pad = K * K, H * W, K // 2
    KC = KK * Cin
    Coutp = _round_up(Cout, 128)      # lane-dense output channels

    lin_scale = 1.0 / math.sqrt(D)
    conv_scale = 1.0 / math.sqrt(Cin * K * K)

    # --- row-tile selection (small target so the toy shapes exercise the HW grid axis;
    #     production sizes want 512-2048 rows per tile, VMEM permitting) ---
    TH = H
    for cand in range(1, H + 1):
        if H % cand == 0 and (cand * W) % 8 == 0 and cand * W <= 128:
            TH = cand
    nH = H // TH
    TW = TH * W
    WIN = _round_up(TW + (K - 1) * W + 2 * pad, 8)   # halo window read per tile
    L = (nH - 1) * TW + WIN                          # flat (H-padded) length incl. halo slack

    # --- glue: NCHW -> NHWC, pad H, flatten (H,W), small flat halo pad, bf16 for the MXU ---
    x_nhwc = jnp.transpose(x_nchw, (0, 2, 3, 1))
    x_flat = jnp.pad(x_nhwc, ((0, 0), (pad, pad), (0, 0), (0, 0)))
    x_flat = x_flat.reshape(B, (H + 2 * pad) * W, Cin)
    x_flat = jnp.pad(x_flat, ((0, 0), (pad, L - pad - (H + 2 * pad) * W), (0, 0)))
    x_flat = x_flat.astype(jnp.bfloat16)

    dlat3 = dlatents.reshape(B, 1, D).astype(jnp.float32)
    noise3 = noise_nchw.reshape(B, HW, 1).astype(jnp.float32)

    w2 = jnp.pad(wbase.reshape(KC, Cout), ((0, 0), (0, Coutp - Cout))).astype(jnp.float32)
    wlin_t = jnp.tile(jnp.transpose(wlin), (KK, 1)).astype(jnp.float32)       # (KC, D)
    bmod_col = jnp.tile(bmod.reshape(Cin, 1), (KK, 1)).astype(jnp.float32)    # (KC, 1)
    bias_row = jnp.pad(bias, (0, Coutp - Cout)).reshape(1, Coutp).astype(jnp.float32)
    nstr1 = nstr.reshape(1).astype(jnp.float32)

    kernel_fn = functools.partial(_modconv_kernel, K=K, W=W, TH=TH, WIN=WIN,
                                  lin_scale=lin_scale, conv_scale=conv_scale)

    out = pl.pallas_call(
        kernel_fn,
        out_shape=jax.ShapeDtypeStruct((B, HW, Coutp), jnp.float32),
        grid_spec=pltpu.PrefetchScalarGridSpec(
            num_scalar_prefetch=0,
            grid=(B, nH),
            in_specs=[
                pl.BlockSpec((1, 1, D), lambda b, h: (b, 0, 0)),          # dlatents
                pl.BlockSpec((1, L, Cin), lambda b, h: (b, 0, 0)),        # flat padded sample
                pl.BlockSpec((1, TW, 1), lambda b, h: (b, h, 0)),         # noise tile
                pl.BlockSpec((KC, Coutp), lambda b, h: (0, 0)),           # conv weight
                pl.BlockSpec((KC, D), lambda b, h: (0, 0)),               # modulation weight
                pl.BlockSpec((KC, 1), lambda b, h: (0, 0)),               # modulation bias
                pl.BlockSpec((1, Coutp), lambda b, h: (0, 0)),            # layer bias
                pl.BlockSpec(memory_space=pltpu.MemorySpace.SMEM),        # noise strength
            ],
            out_specs=pl.BlockSpec((1, TW, Coutp), lambda b, h: (b, h, 0)),
            scratch_shapes=[pltpu.VMEM((TW, KC), jnp.float32)],
        ),
        compiler_params=pltpu.CompilerParams(
            dimension_semantics=("parallel", "parallel"),
            vmem_limit_bytes=32 * 1024 * 1024),
    )(dlat3, x_flat, noise3, w2, wlin_t, bmod_col, bias_row, nstr1)

    out = out[:, :, :Cout].reshape(B, H, W, Cout)
    return jnp.transpose(out, (0, 3, 1, 2))                                  # back to NCHW


def reference_forward(x, dlat, noise, params, *, kernel):
    """Pure-JAX reference (grouped modulated conv), matches PyTorch semantics."""
    wbase, wlin = params["w_conv"], params["w_mod"]
    bmod, bias, nstr = params["b_mod"], params["bias"], params["noise_strength"]
    B, Cin, H, W = x.shape
    K = kernel
    Cout = wbase.shape[-1]
    D = dlat.shape[-1]
    lin_scale = 1.0 / math.sqrt(D)
    conv_scale = 1.0 / math.sqrt(Cin * K * K)

    style = jnp.dot(dlat, wlin, precision=jax.lax.Precision.HIGHEST) * lin_scale + bmod  # (B, Cin)
    w_oikk = jnp.transpose(wbase.reshape(K, K, Cin, Cout), (3, 2, 0, 1))                 # (Cout,Cin,K,K)
    w = conv_scale * w_oikk[None] * style[:, None, :, None, None]                        # per-sample weights
    demod = jax.lax.rsqrt(jnp.sum(w * w, axis=(2, 3, 4), keepdims=True) + 1e-8)
    w = w * demod

    outs = []
    for b in range(B):  # grouped conv, one group per batch sample
        outs.append(jax.lax.conv_general_dilated(
            x[b:b + 1], w[b], window_strides=(1, 1),
            padding=[(K // 2, K // 2)] * 2,
            dimension_numbers=("NCHW", "OIHW", "NCHW"),
            precision=jax.lax.Precision.HIGHEST))
    o = jnp.concatenate(outs, axis=0)
    o = o + nstr * noise
    o = o + bias[None, :, None, None]
    return jnp.where(o >= 0.0, o, 0.2 * o) * math.sqrt(2.0)


if __name__ == "__main__":
    B, Cin, Cout, K, H, W, D = 2, 4, 8, 3, 16, 16, 32

    key = jax.random.PRNGKey(0)
    k1, k2, k3, k4, k5, k6 = jax.random.split(key, 6)

    x = jax.random.normal(k1, (B, Cin, H, W), jnp.float32)
    dlat = jax.random.normal(k2, (B, D), jnp.float32)
    noise = jax.random.normal(k3, (B, 1, H, W), jnp.float32)   # supplied noise_input

    params = {
        "w_conv": jax.random.normal(k4, (K * K, Cin, Cout), jnp.float32),  # modconv weight (randn)
        "w_mod": jax.random.normal(k5, (D, Cin), jnp.float32),             # modulation linear weight
        "b_mod": jnp.ones((Cin,), jnp.float32),                            # modulation bias (init 1)
        # __init__ uses zeros for bias / noise_strength; small deterministic
        # nonzero values here so the noise + bias paths are actually exercised.
        "bias": 0.1 * jax.random.normal(k6, (Cout,), jnp.float32),
        "noise_strength": jnp.array([0.25], jnp.float32),
    }

    out = mod_conv_layer(x, dlat, noise, params, kernel=K)
    out = jax.block_until_ready(out)

    ref = reference_forward(x, dlat, noise, params, kernel=K)
    assert out.shape == (B, Cout, H, W), out.shape
    # bf16 MXU operands (f32 accumulation; demod / noise / activation kept in f32):
    # compare against the all-f32 reference with a correspondingly relaxed tolerance.
    assert jnp.allclose(out, ref, rtol=3e-2, atol=3e-2), "Pallas output mismatch vs reference"

    print("KERNEL_OK")
</pallas_src>

<mosaic_0001>
module attributes {stable_mosaic.version = 11 : i64} {
  func.func @_modconv_kernel(%arg0: i32, %arg1: i32, %arg2: memref<1x1x32xf32, #tpu.memory_space<vmem>>, %arg3: memref<1x296x4xbf16, #tpu.memory_space<vmem>>, %arg4: memref<1x128x1xf32, #tpu.memory_space<vmem>>, %arg5: memref<36x128xf32, #tpu.memory_space<vmem>>, %arg6: memref<36x32xf32, #tpu.memory_space<vmem>>, %arg7: memref<36x1xf32, #tpu.memory_space<vmem>>, %arg8: memref<1x128xf32, #tpu.memory_space<vmem>>, %arg9: memref<1xf32, #tpu.memory_space<smem>>, %arg10: memref<1x128x128xf32, #tpu.memory_space<vmem>>, %arg11: memref<128x36xf32, #tpu.memory_space<vmem>>) attributes {dimension_semantics = [#tpu.dimension_semantics<parallel>, #tpu.dimension_semantics<parallel>], iteration_bounds = array<i64: 2, 2>, scalar_prefetch = 0 : i64, scratch_operands = 1 : i64, tpu.core_type = #tpu.core_type<tc>, window_params = [{transform_indices = @transform_0, window_bounds = array<i64: 1, 1, 32>}, {transform_indices = @transform_1, window_bounds = array<i64: 1, 296, 4>}, {transform_indices = @transform_2, window_bounds = array<i64: 1, 128, 1>}, {pipeline_mode = #tpu.pipeline_mode<synchronous>, transform_indices = @transform_3, window_bounds = array<i64: 36, 128>}, {pipeline_mode = #tpu.pipeline_mode<synchronous>, transform_indices = @transform_4, window_bounds = array<i64: 36, 32>}, {pipeline_mode = #tpu.pipeline_mode<synchronous>, transform_indices = @transform_5, window_bounds = array<i64: 36, 1>}, {pipeline_mode = #tpu.pipeline_mode<synchronous>, transform_indices = @transform_6, window_bounds = array<i64: 1, 128>}, {transform_indices = @transform_7, window_bounds = array<i64: 1>}, {transform_indices = @transform_8, window_bounds = array<i64: 1, 128, 128>}]} {
    %c0 = arith.constant 0 : index
    %c0_0 = arith.constant 0 : index
    %0 = vector.load %arg6[%c0, %c0_0] : memref<36x32xf32, #tpu.memory_space<vmem>>, vector<36x32xf32>
    %c0_1 = arith.constant 0 : index
    %c0_2 = arith.constant 0 : index
    %c0_3 = arith.constant 0 : index
    %1 = vector.load %arg2[%c0_1, %c0_2, %c0_3] : memref<1x1x32xf32, #tpu.memory_space<vmem>>, vector<1x1x32xf32>
    %2 = vector.shape_cast %1 : vector<1x1x32xf32> to vector<1x32xf32>
    %3 = vector.broadcast %2 : vector<1x32xf32> to vector<36x32xf32>
    %4 = arith.mulf %0, %3 : vector<36x32xf32>
    %cst = arith.constant dense<0.000000e+00> : vector<36xf32>
    %5 = vector.multi_reduction <add>, %4, %cst [1] : vector<36x32xf32> to vector<36xf32>
    %6 = vector.shape_cast %5 : vector<36xf32> to vector<36x1xf32>
    %cst_4 = arith.constant 0.176776692 : f32
    %7 = vector.broadcast %cst_4 : f32 to vector<36x1xf32>
    %8 = arith.mulf %6, %7 : vector<36x1xf32>
    %c0_5 = arith.constant 0 : index
    %c0_6 = arith.constant 0 : index
    %9 = vector.load %arg7[%c0_5, %c0_6] : memref<36x1xf32, #tpu.memory_space<vmem>>, vector<36x1xf32>
    %10 = arith.addf %8, %9 : vector<36x1xf32>
    %c0_7 = arith.constant 0 : index
    %c0_8 = arith.constant 0 : index
    %11 = vector.load %arg5[%c0_7, %c0_8] : memref<36x128xf32, #tpu.memory_space<vmem>>, vector<36x128xf32>
    %12 = vector.broadcast %10 : vector<36x1xf32> to vector<36x128xf32>
    %13 = arith.mulf %11, %12 : vector<36x128xf32>
    %14 = arith.mulf %13, %13 : vector<36x128xf32>
    %cst_9 = arith.constant dense<0.000000e+00> : vector<128xf32>
    %15 = vector.multi_reduction <add>, %14, %cst_9 [0] : vector<36x128xf32> to vector<128xf32>
    %16 = vector.shape_cast %15 : vector<128xf32> to vector<1x128xf32>
    %cst_10 = arith.constant 0.027777778 : f32
    %17 = vector.broadcast %cst_10 : f32 to vector<1x128xf32>
    %18 = arith.mulf %16, %17 : vector<1x128xf32>
    %cst_11 = arith.constant 9.99999993E-9 : f32
    %19 = vector.broadcast %cst_11 : f32 to vector<1x128xf32>
    %20 = arith.addf %18, %19 : vector<1x128xf32>
    %21 = math.rsqrt %20 : vector<1x128xf32>
    %cst_12 = arith.constant 0.166666672 : f32
    %22 = vector.broadcast %cst_12 : f32 to vector<1x128xf32>
    %23 = arith.mulf %22, %21 : vector<1x128xf32>
    %24 = vector.broadcast %23 : vector<1x128xf32> to vector<36x128xf32>
    %25 = arith.mulf %13, %24 : vector<36x128xf32>
    %26 = arith.truncf %25 : vector<36x128xf32> to vector<36x128xbf16>
    %c128_i32 = arith.constant 128 : i32
    %27 = arith.muli %arg1, %c128_i32 : i32
    %28 = tpu.assume_multiple %27, 128 : i32
    %c0_13 = arith.constant 0 : index
    %29 = arith.index_cast %28 : i32 to index
    %c0_14 = arith.constant 0 : index
    %30 = vector.load %arg3[%c0_13, %29, %c0_14] : memref<1x296x4xbf16, #tpu.memory_space<vmem>>, vector<1x168x4xbf16>
    %31 = vector.shape_cast %30 : vector<1x168x4xbf16> to vector<168x4xbf16>
    %32 = arith.extf %31 : vector<168x4xbf16> to vector<168x4xf32>
    %33 = tpu.iota {dimensions = array<i32: 0>} : vector<128x1xi32>
    %c16_i32 = arith.constant 16 : i32
    %c0_i32 = arith.constant 0 : i32
    %34 = arith.cmpi eq, %c16_i32, %c0_i32 : i32
    %c1_i32 = arith.constant 1 : i32
    %35 = arith.select %34, %c1_i32, %c16_i32 : i32
    %36 = vector.broadcast %35 : i32 to vector<128x1xi32>
    %37 = arith.remsi %33, %36 : vector<128x1xi32>
    %c0_i32_15 = arith.constant 0 : i32
    %38 = vector.broadcast %c0_i32_15 : i32 to vector<128x1xi32>
    %39 = arith.cmpi ne, %37, %38 : vector<128x1xi32>
    %c0_i32_16 = arith.constant 0 : i32
    %40 = vector.broadcast %c0_i32_16 : i32 to vector<128x1xi32>
    %41 = arith.cmpi slt, %37, %40 : vector<128x1xi32>
    %c0_i32_17 = arith.constant 0 : i32
    %42 = arith.cmpi slt, %35, %c0_i32_17 : i32
    %43 = vector.broadcast %42 : i1 to vector<128x1xi1>
    %44 = vector.broadcast %43 : vector<128x1xi1> to vector<128x1xi1>
    %45 = arith.xori %41, %44 : vector<128x1xi1>
    %46 = arith.andi %45, %39 : vector<128x1xi1>
    %47 = vector.broadcast %35 : i32 to vector<128x1xi32>
    %48 = arith.addi %37, %47 : vector<128x1xi32>
    %49 = arith.select %46, %48, %37 : vector<128x1xi1>, vector<128x1xi32>
    %50 = vector.extract_strided_slice %32 {offsets = [0, 0], sizes = [128, 4], strides = [1, 1]} : vector<168x4xf32> to vector<128x4xf32>
    %c1_i32_18 = arith.constant 1 : i32
    %51 = vector.broadcast %c1_i32_18 : i32 to vector<128x1xi32>
    %52 = arith.cmpi sge, %49, %51 : vector<128x1xi32>
    %cst_19 = arith.constant 0.000000e+00 : f32
    %53 = vector.shape_cast %52 : vector<128x1xi1> to vector<128x1xi1>
    %54 = vector.broadcast %53 : vector<128x1xi1> to vector<128x4xi1>
    %55 = vector.broadcast %cst_19 : f32 to vector<128x4xf32>
    %56 = arith.select %54, %50, %55 : vector<128x4xi1>, vector<128x4xf32>
    %c0_20 = arith.constant 0 : index
    %c0_21 = arith.constant 0 : index
    %57 = vector.load %arg11[%c0_20, %c0_21] : memref<128x36xf32, #tpu.memory_space<vmem>>, vector<128x4xf32>
    tpu.vector_store %arg11[%c0_20, %c0_21], %56 {strides = array<i32>} : memref<128x36xf32, #tpu.memory_space<vmem>>, vector<128x4xf32>,
    %58 = vector.extract_strided_slice %32 {offsets = [1, 0], sizes = [128, 4], strides = [1, 1]} : vector<168x4xf32> to vector<128x4xf32>
    %c0_22 = arith.constant 0 : index
    %c4 = arith.constant 4 : index
    %59 = vector.load %arg11[%c0_22, %c4] : memref<128x36xf32, #tpu.memory_space<vmem>>, vector<128x4xf32>
    tpu.vector_store %arg11[%c0_22, %c4], %58 {strides = array<i32>} : memref<128x36xf32, #tpu.memory_space<vmem>>, vector<128x4xf32>,
    %60 = vector.extract_strided_slice %32 {offsets = [2, 0], sizes = [128, 4], strides = [1, 1]} : vector<168x4xf32> to vector<128x4xf32>
    %c15_i32 = arith.constant 15 : i32
    %61 = vector.broadcast %c15_i32 : i32 to vector<128x1xi32>
    %62 = arith.cmpi slt, %49, %61 : vector<128x1xi32>
    %cst_23 = arith.constant 0.000000e+00 : f32
    %63 = vector.shape_cast %62 : vector<128x1xi1> to vector<128x1xi1>
    %64 = vector.broadcast %63 : vector<128x1xi1> to vector<128x4xi1>
    %65 = vector.broadcast %cst_23 : f32 to vector<128x4xf32>
    %66 = arith.select %64, %60, %65 : vector<128x4xi1>, vector<128x4xf32>
    %c0_24 = arith.constant 0 : index
    %c8 = arith.constant 8 : index
    %67 = vector.load %arg11[%c0_24, %c8] : memref<128x36xf32, #tpu.memory_space<vmem>>, vector<128x4xf32>
    tpu.vector_store %arg11[%c0_24, %c8], %66 {strides = array<i32>} : memref<128x36xf32, #tpu.memory_space<vmem>>, vector<128x4xf32>,
    %68 = vector.extract_strided_slice %32 {offsets = [16, 0], sizes = [128, 4], strides = [1, 1]} : vector<168x4xf32> to vector<128x4xf32>
    %c1_i32_25 = arith.constant 1 : i32
    %69 = vector.broadcast %c1_i32_25 : i32 to vector<128x1xi32>
    %70 = arith.cmpi sge, %49, %69 : vector<128x1xi32>
    %cst_26 = arith.constant 0.000000e+00 : f32
    %71 = vector.shape_cast %70 : vector<128x1xi1> to vector<128x1xi1>
    %72 = vector.broadcast %71 : vector<128x1xi1> to vector<128x4xi1>
    %73 = vector.broadcast %cst_26 : f32 to vector<128x4xf32>
    %74 = arith.select %72, %68, %73 : vector<128x4xi1>, vector<128x4xf32>
    %c0_27 = arith.constant 0 : index
    %c12 = arith.constant 12 : index
    %75 = vector.load %arg11[%c0_27, %c12] : memref<128x36xf32, #tpu.memory_space<vmem>>, vector<128x4xf32>
    tpu.vector_store %arg11[%c0_27, %c12], %74 {strides = array<i32>} : memref<128x36xf32, #tpu.memory_space<vmem>>, vector<128x4xf32>,
    %76 = vector.extract_strided_slice %32 {offsets = [17, 0], sizes = [128, 4], strides = [1, 1]} : vector<168x4xf32> to vector<128x4xf32>
    %c0_28 = arith.constant 0 : index
    %c16 = arith.constant 16 : index
    %77 = vector.load %arg11[%c0_28, %c16] : memref<128x36xf32, #tpu.memory_space<vmem>>, vector<128x4xf32>
    tpu.vector_store %arg11[%c0_28, %c16], %76 {strides = array<i32>} : memref<128x36xf32, #tpu.memory_space<vmem>>, vector<128x4xf32>,
    %78 = vector.extract_strided_slice %32 {offsets = [18, 0], sizes = [128, 4], strides = [1, 1]} : vector<168x4xf32> to vector<128x4xf32>
    %c15_i32_29 = arith.constant 15 : i32
    %79 = vector.broadcast %c15_i32_29 : i32 to vector<128x1xi32>
    %80 = arith.cmpi slt, %49, %79 : vector<128x1xi32>
    %cst_30 = arith.constant 0.000000e+00 : f32
    %81 = vector.shape_cast %80 : vector<128x1xi1> to vector<128x1xi1>
    %82 = vector.broadcast %81 : vector<128x1xi1> to vector<128x4xi1>
    %83 = vector.broadcast %cst_30 : f32 to vector<128x4xf32>
    %84 = arith.select %82, %78, %83 : vector<128x4xi1>, vector<128x4xf32>
    %c0_31 = arith.constant 0 : index
    %c20 = arith.constant 20 : index
    %85 = vector.load %arg11[%c0_31, %c20] : memref<128x36xf32, #tpu.memory_space<vmem>>, vector<128x4xf32>
    tpu.vector_store %arg11[%c0_31, %c20], %84 {strides = array<i32>} : memref<128x36xf32, #tpu.memory_space<vmem>>, vector<128x4xf32>,
    %86 = vector.extract_strided_slice %32 {offsets = [32, 0], sizes = [128, 4], strides = [1, 1]} : vector<168x4xf32> to vector<128x4xf32>
    %c1_i32_32 = arith.constant 1 : i32
    %87 = vector.broadcast %c1_i32_32 : i32 to vector<128x1xi32>
    %88 = arith.cmpi sge, %49, %87 : vector<128x1xi32>
    %cst_33 = arith.constant 0.000000e+00 : f32
    %89 = vector.shape_cast %88 : vector<128x1xi1> to vector<128x1xi1>
    %90 = vector.broadcast %89 : vector<128x1xi1> to vector<128x4xi1>
    %91 = vector.broadcast %cst_33 : f32 to vector<128x4xf32>
    %92 = arith.select %90, %86, %91 : vector<128x4xi1>, vector<128x4xf32>
    %c0_34 = arith.constant 0 : index
    %c24 = arith.constant 24 : index
    %93 = vector.load %arg11[%c0_34, %c24] : memref<128x36xf32, #tpu.memory_space<vmem>>, vector<128x4xf32>
    tpu.vector_store %arg11[%c0_34, %c24], %92 {strides = array<i32>} : memref<128x36xf32, #tpu.memory_space<vmem>>, vector<128x4xf32>,
    %94 = vector.extract_strided_slice %32 {offsets = [33, 0], sizes = [128, 4], strides = [1, 1]} : vector<168x4xf32> to vector<128x4xf32>
    %c0_35 = arith.constant 0 : index
    %c28 = arith.constant 28 : index
    %95 = vector.load %arg11[%c0_35, %c28] : memref<128x36xf32, #tpu.memory_space<vmem>>, vector<128x4xf32>
    tpu.vector_store %arg11[%c0_35, %c28], %94 {strides = array<i32>} : memref<128x36xf32, #tpu.memory_space<vmem>>, vector<128x4xf32>,
    %96 = vector.extract_strided_slice %32 {offsets = [34, 0], sizes = [128, 4], strides = [1, 1]} : vector<168x4xf32> to vector<128x4xf32>
    %c15_i32_36 = arith.constant 15 : i32
    %97 = vector.broadcast %c15_i32_36 : i32 to vector<128x1xi32>
    %98 = arith.cmpi slt, %49, %97 : vector<128x1xi32>
    %cst_37 = arith.constant 0.000000e+00 : f32
    %99 = vector.shape_cast %98 : vector<128x1xi1> to vector<128x1xi1>
    %100 = vector.broadcast %99 : vector<128x1xi1> to vector<128x4xi1>
    %101 = vector.broadcast %cst_37 : f32 to vector<128x4xf32>
    %102 = arith.select %100, %96, %101 : vector<128x4xi1>, vector<128x4xf32>
    %c0_38 = arith.constant 0 : index
    %c32 = arith.constant 32 : index
    %103 = vector.load %arg11[%c0_38, %c32] : memref<128x36xf32, #tpu.memory_space<vmem>>, vector<128x4xf32>
    tpu.vector_store %arg11[%c0_38, %c32], %102 {strides = array<i32>} : memref<128x36xf32, #tpu.memory_space<vmem>>, vector<128x4xf32>,
    %c0_39 = arith.constant 0 : index
    %c0_40 = arith.constant 0 : index
    %104 = vector.load %arg11[%c0_39, %c0_40] : memref<128x36xf32, #tpu.memory_space<vmem>>, vector<128x36xf32>
    %105 = arith.truncf %104 : vector<128x36xf32> to vector<128x36xbf16>
    %cst_41 = arith.constant dense<0.000000e+00> : vector<128x128xf32>
    %106 = tpu.matmul %105, %26, %cst_41 {dimension_numbers = #tpu.dot_dimension_numbers<[1], [0], [0], [1], [0, 0, 1, 1], [], []>} : vector<128x36xbf16>, vector<36x128xbf16>, vector<128x128xf32> -> vector<128x128xf32>
    %c0_42 = arith.constant 0 : index
    %107 = memref.load %arg9[%c0_42] : memref<1xf32, #tpu.memory_space<smem>>
    %c0_43 = arith.constant 0 : index
    %c0_44 = arith.constant 0 : index
    %c0_45 = arith.constant 0 : index
    %108 = vector.load %arg4[%c0_43, %c0_44, %c0_45] : memref<1x128x1xf32, #tpu.memory_space<vmem>>, vector<1x128x1xf32>
    %109 = vector.shape_cast %108 : vector<1x128x1xf32> to vector<128x1xf32>
    %110 = vector.broadcast %107 : f32 to vector<128x1xf32>
    %111 = arith.mulf %110, %109 : vector<128x1xf32>
    %112 = vector.broadcast %111 : vector<128x1xf32> to vector<128x128xf32>
    %113 = arith.addf %106, %112 : vector<128x128xf32>
    %c0_46 = arith.constant 0 : index
    %c0_47 = arith.constant 0 : index
    %114 = vector.load %arg8[%c0_46, %c0_47] : memref<1x128xf32, #tpu.memory_space<vmem>>, vector<1x128xf32>
    %115 = vector.broadcast %114 : vector<1x128xf32> to vector<128x128xf32>
    %116 = arith.addf %113, %115 : vector<128x128xf32>
    %cst_48 = arith.constant 0.000000e+00 : f32
    %117 = vector.broadcast %cst_48 : f32 to vector<128x128xf32>
    %118 = arith.cmpf oge, %116, %117 : vector<128x128xf32>
    %cst_49 = arith.constant 2.000000e-01 : f32
    %119 = vector.broadcast %cst_49 : f32 to vector<128x128xf32>
    %120 = arith.mulf %119, %116 : vector<128x128xf32>
    %121 = arith.select %118, %116, %120 : vector<128x128xi1>, vector<128x128xf32>
    %cst_50 = arith.constant 1.41421354 : f32
    %122 = vector.broadcast %cst_50 : f32 to vector<128x128xf32>
    %123 = arith.mulf %121, %122 : vector<128x128xf32>
    %c0_51 = arith.constant 0 : index
    %c0_52 = arith.constant 0 : index
    %c0_53 = arith.constant 0 : index
    %124 = vector.load %arg10[%c0_51, %c0_52, %c0_53] : memref<1x128x128xf32, #tpu.memory_space<vmem>>, vector<1x128x128xf32>
    %125 = vector.shape_cast %124 : vector<1x128x128xf32> to vector<128x128xf32>
    %126 = vector.shape_cast %123 : vector<128x128xf32> to vector<1x128x128xf32>
    tpu.vector_store %arg10[%c0_51, %c0_52, %c0_53], %126 {strides = array<i32>} : memref<1x128x128xf32, #tpu.memory_space<vmem>>, vector<1x128x128xf32>,
    return
  }
  func.func @transform_0(%arg0: i32, %arg1: i32) -> (i32, i32, i32) {
    %c0_i32 = arith.constant 0 : i32
    %c0_i32_0 = arith.constant 0 : i32
    %c0_i32_1 = arith.constant 0 : i32
    return %arg0, %c0_i32, %c0_i32_0 : i32, i32, i32
  }
  func.func @transform_1(%arg0: i32, %arg1: i32) -> (i32, i32, i32) {
    %c0_i32 = arith.constant 0 : i32
    %c0_i32_0 = arith.constant 0 : i32
    %c0_i32_1 = arith.constant 0 : i32
    return %arg0, %c0_i32, %c0_i32_0 : i32, i32, i32
  }
  func.func @transform_2(%arg0: i32, %arg1: i32) -> (i32, i32, i32) {
    %c0_i32 = arith.constant 0 : i32
    %c0_i32_0 = arith.constant 0 : i32
    return %arg0, %arg1, %c0_i32 : i32, i32, i32
  }
  func.func @transform_3(%arg0: i32, %arg1: i32) -> (i32, i32) {
    %c0_i32 = arith.constant 0 : i32
    %c0_i32_0 = arith.constant 0 : i32
    %c0_i32_1 = arith.constant 0 : i32
    return %c0_i32, %c0_i32_0 : i32, i32
  }
  func.func @transform_4(%arg0: i32, %arg1: i32) -> (i32, i32) {
    %c0_i32 = arith.constant 0 : i32
    %c0_i32_0 = arith.constant 0 : i32
    %c0_i32_1 = arith.constant 0 : i32
    return %c0_i32, %c0_i32_0 : i32, i32
  }
  func.func @transform_5(%arg0: i32, %arg1: i32) -> (i32, i32) {
    %c0_i32 = arith.constant 0 : i32
    %c0_i32_0 = arith.constant 0 : i32
    %c0_i32_1 = arith.constant 0 : i32
    return %c0_i32, %c0_i32_0 : i32, i32
  }
  func.func @transform_6(%arg0: i32, %arg1: i32) -> (i32, i32) {
    %c0_i32 = arith.constant 0 : i32
    %c0_i32_0 = arith.constant 0 : i32
    %c0_i32_1 = arith.constant 0 : i32
    return %c0_i32, %c0_i32_0 : i32, i32
  }
  func.func @transform_7(%arg0: i32, %arg1: i32) -> i32 {
    %c0_i32 = arith.constant 0 : i32
    %c0_i32_0 = arith.constant 0 : i32
    return %c0_i32 : i32
  }
  func.func @transform_8(%arg0: i32, %arg1: i32) -> (i32, i32, i32) {
    %c0_i32 = arith.constant 0 : i32
    %c0_i32_0 = arith.constant 0 : i32
    return %arg0, %arg1, %c0_i32 : i32, i32, i32
  }
}

</mosaic_0001>

<llo_original>
// kernel: tpu_custom_call.1
$region0: #{tpu_custom_call.1}
  #allocation0 [shape = 'u32[]', space=smem, size = 0x4, offset = 0x4, fixed_abs, tag = 'smem constant byte address 0x4 - core index']
  #allocation1 [shape = 'u32[144,128]{1,0:T(1,128)}', space=vmem, size = 0x12000, scoped, tag = 'internal scratch']
  #allocation2 [shape = 'f32[128,36]{1,0:T(8,128)}', space=vmem, size = 0x10000, scoped, tag = 'scratch operand']
  #allocation3 [shape = 'f32[1]{0:T(128)S(6)}', space=smem, size = 0x200, scoped, tag = 'scoped memory for tpu_custom_call.1']
  %s0 = inlined_call_operand.vmem [shape: f32[2,1,32], index: 0, kind: input, shape index: {}]
  %s1 = inlined_call_operand.vmem [shape: bf16[2,296,4], index: 1, kind: input, shape index: {}]
  %s2 = inlined_call_operand.vmem [shape: f32[2,256,1], index: 2, kind: input, shape index: {}]
  %s3 = inlined_call_operand.vmem [shape: f32[36,128], index: 3, kind: input, shape index: {}]
  %s4 = inlined_call_operand.vmem [shape: f32[36,32], index: 4, kind: input, shape index: {}]
  %s5 = inlined_call_operand.vmem [shape: f32[36,1], index: 5, kind: input, shape index: {}]
  %s6 = inlined_call_operand.vmem [shape: f32[1,128], index: 6, kind: input, shape index: {}]
  %s7 = inlined_call_operand.<no memory space> [shape: f32[1], index: 7, kind: input, shape index: {}]
  %s8 = inlined_call_operand.hbm [shape: f32[2,256,128], index: 8, kind: output, shape index: {}]
  %s9 = sld [smem:[#allocation0]]
  $region65: #{tpu_custom_call.1} parent=0
    _
  %s11 = ssub.s32 1, %s9
  %s12 = scalar_select 0, %s11, %s9
  %13 = sst [smem:[#allocation3]] %s7
  $region1: #{tpu_custom_call.1} parent=0
    #allocation4 [shape = 'u8[131072]{0}', space=vmem, size = 0x20000, scoped, tag = 'output window, operand 0']
    #allocation5 [shape = 's32[2]{0}', space=sflag, size = 0x8, scoped, tag = 'scoped memory for tpu_custom_call.1']
    %14 = vsyncpa [#allocation5], 0
    %s15 = scalar_lea.sflag [#allocation5], 1
    %16 = vsyncpa %s15, 0
    loop: start=0, step=1, limit=6
    $region2: #{tpu_custom_call.1} parent=1 // loop_pre_header
      _
    $region3: #{tpu_custom_call.1} parent=1 // loop_header
      %s18 = sphi 0, %s22
      %p19 = scmp.ge.s32.totalorder %s18, 6
      %s25 = sphi 0, %s37
      %s26 = sphi 0, %s33
      %s27 = sphi 0, %s25
      %s28 = sphi 0, %s26
      %s29 = sphi 0, %s27
      %s30 = sphi 0, %s28
      %s40 = sphi 0, %s42
      %s43 = sphi 0, %s40
      %s44 = sphi 0, %s43
      %s60 = sphi 0, %s44
      %s66 = sphi 0, %s68
      %s69 = sphi 0, %s66
      %s70 = sphi 0, %s69
      %s86 = sphi 0, %s70
      %s94 = sphi 0, %s96
      %s97 = sphi 0, %s94
      %s98 = sphi 0, %s97
      %s114 = sphi 0, %s98
      %s118 = sphi 0, %s118
      %s120 = sphi 0, %s118
      %s121 = sphi 0, %s120
      %s135 = sphi 0, %s121
      %s139 = sphi 0, %s139
      %s141 = sphi 0, %s139
      %s142 = sphi 0, %s141
      %s156 = sphi 0, %s142
      %s160 = sphi 0, %s160
      %s162 = sphi 0, %s160
      %s163 = sphi 0, %s162
      %s177 = sphi 0, %s163
      %s181 = sphi 0, %s181
      %s183 = sphi 0, %s181
      %s184 = sphi 0, %s183
      %s198 = sphi 0, %s184
      %s202 = sphi 0, %s202
      %s204 = sphi 0, %s202
      %s205 = sphi 0, %s204
      %s219 = sphi 0, %s205
      %s227 = sphi 0, %s229
      %s230 = sphi 0, %s227
      %s231 = sphi 0, %s230
      %s247 = sphi 0, %s231
    $region4: #{tpu_custom_call.1} parent=1 // loop_header_branch
      %21 = sbr.rel (%p19) target = $region8
    $region5: #{tpu_custom_call.1} parent=1 // loop_body
      %s23 = ssub.s32 %s18, 1
      %s24 = ssub.s32 %s18, 2
      %s31 = sadd.s32 1, %s26
      %p32 = scmp.ge.s32.totalorder %s31, 2
      %s33 = scalar_select %p32, 0, %s31
      %s34 = sadd.s32 1, %s25
      %s35 = scalar_select %p32, %s34, %s25
      %p36 = scmp.ge.s32.totalorder %s35, 2
      %s37 = scalar_select %p36, 0, %s35
      %s38 = ssub.s32 %s25, %s37
      %p39 = scmp.eq.s32.totalorder %s38, 0
      %s41 = sadd.s32 %s40, 1
      %s42 = scalar_select %p39, %s40, %s41
      %p45 = pneg %p39
      %p46 = scmp.eq.s32.totalorder %s18, 3
      %p47 = por %p45, %p46
      %p48 = scmp.ne.s32.totalorder %s40, %s43
      %p49 = scmp.eq.s32.totalorder %s18, 0
      %p50 = por %p48, %p49
      %p51 = scmp.ne.s32.totalorder %s40, %s43
      %p52 = scmp.eq.s32.totalorder %s23, 3
      %p53 = por %p51, %p52
      %p54 = scmp.ne.s32.totalorder %s43, %s44
      %p55 = scmp.eq.s32.totalorder %s23, 0
      %p56 = por %p54, %p55
      %p57 = scmp.ne.s32.totalorder %s43, %s44
      %p58 = scmp.eq.s32.totalorder %s24, 3
      %p59 = por %p57, %p58
      %p61 = scmp.ne.s32.totalorder %s44, %s60
      %p62 = scmp.eq.s32.totalorder %s24, 0
      %p63 = por %p61, %p62
      %s64 = ssub.s32 %s25, %s37
      %p65 = scmp.eq.s32.totalorder %s64, 0
      %s67 = sadd.s32 %s66, 1
      %s68 = scalar_select %p65, %s66, %s67
      %p71 = pneg %p65
      %p72 = scmp.eq.s32.totalorder %s18, 3
      %p73 = por %p71, %p72
      %p74 = scmp.ne.s32.totalorder %s66, %s69
      %p75 = scmp.eq.s32.totalorder %s18, 0
      %p76 = por %p74, %p75
      %p77 = scmp.ne.s32.totalorder %s66, %s69
      %p78 = scmp.eq.s32.totalorder %s23, 3
      %p79 = por %p77, %p78
      %p80 = scmp.ne.s32.totalorder %s69, %s70
      %p81 = scmp.eq.s32.totalorder %s23, 0
      %p82 = por %p80, %p81
      %p83 = scmp.ne.s32.totalorder %s69, %s70
      %p84 = scmp.eq.s32.totalorder %s24, 3
      %p85 = por %p83, %p84
      %p87 = scmp.ne.s32.totalorder %s70, %s86
      %p88 = scmp.eq.s32.totalorder %s24, 0
      %p89 = por %p87, %p88
      %s90 = ssub.s32 %s25, %s37
      %s91 = ssub.s32 %s26, %s33
      %s92 = sor.u32 %s90, %s91
      %p93 = scmp.eq.s32.totalorder %s92, 0
      %s95 = sadd.s32 %s94, 1
      %s96 = scalar_select %p93, %s94, %s95
      %p99 = pneg %p93
      %p100 = scmp.eq.s32.totalorder %s18, 3
      %p101 = por %p99, %p100
      %p102 = scmp.ne.s32.totalorder %s94, %s97
      %p103 = scmp.eq.s32.totalorder %s18, 0
      %p104 = por %p102, %p103
      %p105 = scmp.ne.s32.totalorder %s94, %s97
      %p106 = scmp.eq.s32.totalorder %s23, 3
      %p107 = por %p105, %p106
      %p108 = scmp.ne.s32.totalorder %s97, %s98
      %p109 = scmp.eq.s32.totalorder %s23, 0
      %p110 = por %p108, %p109
      %p111 = scmp.ne.s32.totalorder %s97, %s98
      %p112 = scmp.eq.s32.totalorder %s24, 3
      %p113 = por %p111, %p112
      %p115 = scmp.ne.s32.totalorder %s98, %s114
      %p116 = scmp.eq.s32.totalorder %s24, 0
      %p117 = por %p115, %p116
      %s119 = sadd.s32 %s118, 1
      %p122 = scmp.eq.s32.totalorder %s18, 3
      %p123 = scmp.ne.s32.totalorder %s118, %s120
      %p124 = scmp.eq.s32.totalorder %s18, 0
      %p125 = por %p123, %p124
      %p126 = scmp.ne.s32.totalorder %s118, %s120
      %p127 = scmp.eq.s32.totalorder %s23, 3
      %p128 = por %p126, %p127
      %p129 = scmp.ne.s32.totalorder %s120, %s121
      %p130 = scmp.eq.s32.totalorder %s23, 0
      %p131 = por %p129, %p130
      %p132 = scmp.ne.s32.totalorder %s120, %s121
      %p133 = scmp.eq.s32.totalorder %s24, 3
      %p134 = por %p132, %p133
      %p136 = scmp.ne.s32.totalorder %s121, %s135
      %p137 = scmp.eq.s32.totalorder %s24, 0
      %p138 = por %p136, %p137
      %s140 = sadd.s32 %s139, 1
      %p143 = scmp.eq.s32.totalorder %s18, 3
      %p144 = scmp.ne.s32.totalorder %s139, %s141
      %p145 = scmp.eq.s32.totalorder %s18, 0
      %p146 = por %p144, %p145
      %p147 = scmp.ne.s32.totalorder %s139, %s141
      %p148 = scmp.eq.s32.totalorder %s23, 3
      %p149 = por %p147, %p148
      %p150 = scmp.ne.s32.totalorder %s141, %s142
      %p151 = scmp.eq.s32.totalorder %s23, 0
      %p152 = por %p150, %p151
      %p153 = scmp.ne.s32.totalorder %s141, %s142
      %p154 = scmp.eq.s32.totalorder %s24, 3
      %p155 = por %p153, %p154
      %p157 = scmp.ne.s32.totalorder %s142, %s156
      %p158 = scmp.eq.s32.totalorder %s24, 0
      %p159 = por %p157, %p158
      %s161 = sadd.s32 %s160, 1
      %p164 = scmp.eq.s32.totalorder %s18, 3
      %p165 = scmp.ne.s32.totalorder %s160, %s162
      %p166 = scmp.eq.s32.totalorder %s18, 0
      %p167 = por %p165, %p166
      %p168 = scmp.ne.s32.totalorder %s160, %s162
      %p169 = scmp.eq.s32.totalorder %s23, 3
      %p170 = por %p168, %p169
      %p171 = scmp.ne.s32.totalorder %s162, %s163
      %p172 = scmp.eq.s32.totalorder %s23, 0
      %p173 = por %p171, %p172
      %p174 = scmp.ne.s32.totalorder %s162, %s163
      %p175 = scmp.eq.s32.totalorder %s24, 3
      %p176 = por %p174, %p175
      %p178 = scmp.ne.s32.totalorder %s163, %s177
      %p179 = scmp.eq.s32.totalorder %s24, 0
      %p180 = por %p178, %p179
      %s182 = sadd.s32 %s181, 1
      %p185 = scmp.eq.s32.totalorder %s18, 3
      %p186 = scmp.ne.s32.totalorder %s181, %s183
      %p187 = scmp.eq.s32.totalorder %s18, 0
      %p188 = por %p186, %p187
      %p189 = scmp.ne.s32.totalorder %s181, %s183
      %p190 = scmp.eq.s32.totalorder %s23, 3
      %p191 = por %p189, %p190
      %p192 = scmp.ne.s32.totalorder %s183, %s184
      %p193 = scmp.eq.s32.totalorder %s23, 0
      %p194 = por %p192, %p193
      %p195 = scmp.ne.s32.totalorder %s183, %s184
      %p196 = scmp.eq.s32.totalorder %s24, 3
      %p197 = por %p195, %p196
      %p199 = scmp.ne.s32.totalorder %s184, %s198
      %p200 = scmp.eq.s32.totalorder %s24, 0
      %p201 = por %p199, %p200
      %s203 = sadd.s32 %s202, 1
      %p206 = scmp.eq.s32.totalorder %s18, 3
      %p207 = scmp.ne.s32.totalorder %s202, %s204
      %p208 = scmp.eq.s32.totalorder %s18, 0
      %p209 = por %p207, %p208
      %p210 = scmp.ne.s32.totalorder %s202, %s204
      %p211 = scmp.eq.s32.totalorder %s23, 3
      %p212 = por %p210, %p211
      %p213 = scmp.ne.s32.totalorder %s204, %s205
      %p214 = scmp.eq.s32.totalorder %s23, 0
      %p215 = por %p213, %p214
      %p216 = scmp.ne.s32.totalorder %s204, %s205
      %p217 = scmp.eq.s32.totalorder %s24, 3
      %p218 = por %p216, %p217
      %p220 = scmp.ne.s32.totalorder %s205, %s219
      %p221 = scmp.eq.s32.totalorder %s24, 0
      %p222 = por %p220, %p221
      %s223 = ssub.s32 %s25, %s37
      %s224 = ssub.s32 %s26, %s33
      %s225 = sor.u32 %s223, %s224
      %p226 = scmp.eq.s32.totalorder %s225, 0
      %s228 = sadd.s32 %s227, 1
      %s229 = scalar_select %p226, %s227, %s228
      %p232 = pneg %p226
      %p233 = scmp.eq.s32.totalorder %s18, 3
      %p234 = por %p232, %p233
      %p235 = scmp.ne.s32.totalorder %s227, %s230
      %p236 = scmp.eq.s32.totalorder %s18, 0
      %p237 = por %p235, %p236
      %p238 = scmp.ne.s32.totalorder %s227, %s230
      %p239 = scmp.eq.s32.totalorder %s23, 3
      %p240 = por %p238, %p239
      %p241 = scmp.ne.s32.totalorder %s230, %s231
      %p242 = scmp.eq.s32.totalorder %s23, 0
      %p243 = por %p241, %p242
      %p244 = scmp.ne.s32.totalorder %s230, %s231
      %p245 = scmp.eq.s32.totalorder %s24, 3
      %p246 = por %p244, %p245
      %p248 = scmp.ne.s32.totalorder %s231, %s247
      %p249 = scmp.eq.s32.totalorder %s24, 0
      %p250 = por %p248, %p249
      %p251 = scmp.le.s32.totalorder 1, %s18
      %p252 = scmp.lt.s32.totalorder %s18, 5
      %p253 = pnand %p251, %p252
      %p254 = pneg %p253
      // Predicated region
      $region9: #{tpu_custom_call.1} parent=5 // pred_check
        _
      $region10: #{tpu_custom_call.1} parent=5 // pred_check_branch
        %256 = sbr.rel (%p253) target = $region12
      $region11: #{tpu_custom_call.1} parent=5 // pred_region
        %s257 = ssub.s32 %s18, 1
        // Predicated region
        $region13: #{tpu_custom_call.1} parent=11 // pred_check
          %p258 = pneg %p131
        $region14: #{tpu_custom_call.1} parent=11 // pred_check_branch
          %260 = sbr.rel (%p258) target = $region16
        $region15: #{tpu_custom_call.1} parent=11 // pred_region
          _
        $region16: #{tpu_custom_call.1} parent=11 // pred_fallthru
          _
        // Predicated region
        $region17: #{tpu_custom_call.1} parent=11 // pred_check
          %p261 = pneg %p152
        $region18: #{tpu_custom_call.1} parent=11 // pred_check_branch
          %263 = sbr.rel (%p261) target = $region20
        $region19: #{tpu_custom_call.1} parent=11 // pred_region
          _
        $region20: #{tpu_custom_call.1} parent=11 // pred_fallthru
          _
        // Predicated region
        $region21: #{tpu_custom_call.1} parent=11 // pred_check
          %p264 = pneg %p173
        $region22: #{tpu_custom_call.1} parent=11 // pred_check_branch
          %266 = sbr.rel (%p264) target = $region24
        $region23: #{tpu_custom_call.1} parent=11 // pred_region
          _
        $region24: #{tpu_custom_call.1} parent=11 // pred_fallthru
          _
        // Predicated region
        $region25: #{tpu_custom_call.1} parent=11 // pred_check
          %p267 = pneg %p194
        $region26: #{tpu_custom_call.1} parent=11 // pred_check_branch
          %269 = sbr.rel (%p267) target = $region28
        $region27: #{tpu_custom_call.1} parent=11 // pred_region
          _
        $region28: #{tpu_custom_call.1} parent=11 // pred_fallthru
          _
        // Predicated region
        $region29: #{tpu_custom_call.1} parent=11 // pred_check
          %p270 = pneg %p215
        $region30: #{tpu_custom_call.1} parent=11 // pred_check_branch
          %272 = sbr.rel (%p270) target = $region32
        $region31: #{tpu_custom_call.1} parent=11 // pred_region
          _
        $region32: #{tpu_custom_call.1} parent=11 // pred_fallthru
          _
      $region12: #{tpu_custom_call.1} parent=5 // pred_fallthru
        _
      %p273 = scmp.lt.s32.totalorder %s18, 4
      // Predicated region
      $region33: #{tpu_custom_call.1} parent=5 // pred_check
        %p274 = pneg %p273
      $region34: #{tpu_custom_call.1} parent=5 // pred_check_branch
        %276 = sbr.rel (%p274) target = $region36
      $region35: #{tpu_custom_call.1} parent=5 // pred_region
        // Predicated region
        $region37: #{tpu_custom_call.1} parent=35 // pred_check
          %p277 = pneg %p50
        $region38: #{tpu_custom_call.1} parent=35 // pred_check_branch
          %279 = sbr.rel (%p277) target = $region40
        $region39: #{tpu_custom_call.1} parent=35 // pred_region
          %p280 = scmp.lt.s32.totalorder %s25, 1
          %s281 = scalar_select %p280, %s25, 1
          %s282 = scalar_lea.vmem %s0, %s281
        $region40: #{tpu_custom_call.1} parent=35 // pred_fallthru
          _
        // Predicated region
        $region41: #{tpu_custom_call.1} parent=35 // pred_check
          %p283 = pneg %p76
        $region42: #{tpu_custom_call.1} parent=35 // pred_check_branch
          %285 = sbr.rel (%p283) target = $region44
        $region43: #{tpu_custom_call.1} parent=35 // pred_region
          %p286 = scmp.lt.s32.totalorder %s25, 1
          %s287 = scalar_select %p286, %s25, 1
          %s288 = smul.addr %s287, 37
          %s289 = smul.addr %s288, 4
          %s290 = scalar_lea.vmem %s1, %s289
        $region44: #{tpu_custom_call.1} parent=35 // pred_fallthru
          _
        // Predicated region
        $region45: #{tpu_custom_call.1} parent=35 // pred_check
          %p291 = pneg %p104
        $region46: #{tpu_custom_call.1} parent=35 // pred_check_branch
          %293 = sbr.rel (%p291) target = $region48
        $region47: #{tpu_custom_call.1} parent=35 // pred_region
          %s294 = smul.u32 16, %s26
          %p295 = scmp.lt.s32.totalorder %s25, 1
          %s296 = scalar_select %p295, %s25, 1
          %p297 = scmp.lt.s32.totalorder %s294, 31
          %s298 = scalar_select %p297, %s294, 31
          %s299 = smul.addr %s296, 32
          %s300 = sadd.s32 %s298, %s299
          %s301 = smul.addr %s300, 8
          %s302 = scalar_lea.vmem %s2, %s301
          %s303 = smul.u32 16, %s26
        $region48: #{tpu_custom_call.1} parent=35 // pred_fallthru
          _
      $region36: #{tpu_custom_call.1} parent=5 // pred_fallthru
        _
      %p304 = scmp.le.s32.totalorder 1, %s18
      %p305 = scmp.lt.s32.totalorder %s18, 5
      %p306 = pnand %p304, %p305
      %p307 = pneg %p306
      // Predicated region
      $region49: #{tpu_custom_call.1} parent=5 // pred_check
        _
      $region50: #{tpu_custom_call.1} parent=5 // pred_check_branch
        %309 = sbr.rel (%p306) target = $region52
      $region51: #{tpu_custom_call.1} parent=5 // pred_region
        %s310 = ssub.s32 %s18, 1
        %p311 = scmp.lt.s32.totalorder %s27, 1
        %s312 = scalar_select %p311, %s27, 1
        %s313 = scalar_lea.vmem %s0, %s312
        %p314 = pneg %p56
        %p315 = pneg %p53
        %p316 = scmp.lt.s32.totalorder %s27, 1
        %s317 = scalar_select %p316, %s27, 1
        %s318 = smul.addr %s317, 37
        %s319 = smul.addr %s318, 4
        %s320 = scalar_lea.vmem %s1, %s319
        %p321 = pneg %p82
        %p322 = pneg %p79
        %s323 = smul.u32 16, %s28
        %p324 = scmp.lt.s32.totalorder %s27, 1
        %s325 = scalar_select %p324, %s27, 1
        %p326 = scmp.lt.s32.totalorder %s323, 31
        %s327 = scalar_select %p326, %s323, 31
        %s328 = smul.addr %s325, 32
        %s329 = sadd.s32 %s327, %s328
        %s330 = smul.addr %s329, 8
        %s331 = scalar_lea.vmem %s2, %s330
        %p332 = pneg %p110
        %p333 = pneg %p107
        %p334 = pneg %p131
        %p335 = pneg %p128
        %p336 = pneg %p152
        %p337 = pneg %p149
        %p338 = pneg %p173
        %p339 = pneg %p170
        %p340 = pneg %p194
        %p341 = pneg %p191
        %p342 = pneg %p215
        %p343 = pneg %p212
        %p344 = pneg %p243
        %p345 = pneg %p240
        %s346 = sand.u32 %s230, 1
        %s347 = scalar_lea.sflag [#allocation5], %s346
        %s348 = sand.u32 %s230, 1
        %s349 = smul.addr %s348, 128
        %s350 = scalar_lea.vmem [#allocation4], %s349
        %p351 = scmp.lt.s32.totalorder %s27, 1
        %s352 = scalar_select %p351, %s27, 1
        %s353 = scalar_lea.vmem %s0, %s352
        %p354 = scmp.lt.s32.totalorder %s27, 1
        %s355 = scalar_select %p354, %s27, 1
        %s356 = smul.addr %s355, 37
        %s357 = smul.addr %s356, 4
        %s358 = scalar_lea.vmem %s1, %s357
        %s359 = smul.u32 16, %s28
        %p360 = scmp.lt.s32.totalorder %s27, 1
        %s361 = scalar_select %p360, %s27, 1
        %p362 = scmp.lt.s32.totalorder %s359, 31
        %s363 = scalar_select %p362, %s359, 31
        %s364 = smul.addr %s361, 32
        %s365 = sadd.s32 %s363, %s364
        %s366 = smul.addr %s365, 8
        %s367 = scalar_lea.vmem %s2, %s366
        %s368 = smul.u32 16, %s28
        %s369 = smul.u32 16, %s28
        %v371 = vld [vmem:[%s4] sm:$0xff]
        %v372 = vld [vmem:[%s4 + $0x8] sm:$0xff]
        %v373 = vld [vmem:[%s4 + $0x10] sm:$0xff]
        %v374 = vld [vmem:[%s4 + $0x18] sm:$0xff]
        %v375 = vld [vmem:[%s4 + $0x20] sm:$0xf]
        %v376 = vld [vmem:[%s353] sm:$0x1]
        %v378 = vlaneseq
        %v379 = vshrl.u32 %v378, 7
        %v380 = vsub.s32 0, %v379
        %v381 = vrot.slane %v376, %v380
        %v383 = vmul.f32 %v371, %v381
        %v384 = vmul.f32 %v372, %v381
        %v385 = vmul.f32 %v373, %v381
        %v386 = vmul.f32 %v374, %v381
        %v387 = vmul.f32 %v375, %v381
        %vm388 = vcmask 261120
        %v389 = vsel %vm388, %v383, 0.0
        %390 = vadd.xlane.f32.xlu0 %v389
        %v391 = vpop.xlane.xlu0 %390
        %v392 = vsel %vm388, %v384, 0.0
        %393 = vadd.xlane.f32.xlu0 %v392
        %v394 = vpop.xlane.xlu0 %393
        %v395 = vsel %vm388, %v385, 0.0
        %396 = vadd.xlane.f32.xlu0 %v395
        %v397 = vpop.xlane.xlu0 %396
        %v398 = vsel %vm388, %v386, 0.0
        %399 = vadd.xlane.f32.xlu0 %v398
        %v400 = vpop.xlane.xlu0 %399
        %vm401 = vcmask 257024
        %v402 = vsel %vm401, %v387, 0.0
        %403 = vadd.xlane.f32.xlu0 %v402
        %v404 = vpop.xlane.xlu0 %403
        %v405 = vmul.f32 %v391, 0.17677669
        %v406 = vmul.f32 %v394, 0.17677669
        %v407 = vmul.f32 %v397, 0.17677669
        %v408 = vmul.f32 %v400, 0.17677669
        %v409 = vmul.f32 %v404, 0.17677669
        %v410 = vld [vmem:[%s5] sm:$0xff]
        %v411 = vld [vmem:[%s5 + $0x8] sm:$0xff]
        %v412 = vld [vmem:[%s5 + $0x10] sm:$0xff]
        %v413 = vld [vmem:[%s5 + $0x18] sm:$0xff]
        %v414 = vld [vmem:[%s5 + $0x20] sm:$0xf]
        %v415 = vadd.f32 %v405, %v410
        %v416 = vadd.f32 %v406, %v411
        %v417 = vadd.f32 %v407, %v412
        %v418 = vadd.f32 %v408, %v413
        %v419 = vadd.f32 %v409, %v414
        %v420 = vld [vmem:[%s3] sm:$0xff]
        %v421 = vld [vmem:[%s3 + $0x8] sm:$0xff]
        %v422 = vld [vmem:[%s3 + $0x10] sm:$0xff]
        %v423 = vld [vmem:[%s3 + $0x18] sm:$0xff]
        %v424 = vld [vmem:[%s3 + $0x20] sm:$0xf]
        %426 = vset.pattern.permute.xlu0 0
        %427 = vperm.xlu0 %426, %v415
        %v428 = vpop.permute.xlu0 %427
        %431 = vset.pattern.permute.xlu0 0
        %432 = vperm.xlu0 %431, %v416
        %v433 = vpop.permute.xlu0 %432
        %436 = vset.pattern.permute.xlu0 0
        %437 = vperm.xlu0 %436, %v417
        %v438 = vpop.permute.xlu0 %437
        %441 = vset.pattern.permute.xlu0 0
        %442 = vperm.xlu0 %441, %v418
        %v443 = vpop.permute.xlu0 %442
        %446 = vset.pattern.permute.xlu0 0
        %447 = vperm.xlu0 %446, %v419
        %v448 = vpop.permute.xlu0 %447
        %v450 = vmul.f32 %v420, %v428
        %v451 = vmul.f32 %v421, %v433
        %v452 = vmul.f32 %v422, %v438
        %v453 = vmul.f32 %v423, %v443
        %v454 = vmul.f32 %v424, %v448
        %v455 = vmul.f32 %v450, %v450
        %v456 = vmul.f32 %v451, %v451
        %v457 = vmul.f32 %v452, %v452
        %v458 = vmul.f32 %v453, %v453
        %v459 = vmul.f32 %v454, %v454
        %v460 = vadd.f32 %v455, %v456
        %v461 = vadd.f32 %v460, %v457
        %v462 = vadd.f32 %v461, %v458
        %vm463 = vcmask 1043456
        %v464 = vsel %vm463, %v459, 0.0
        %v465 = vadd.f32 %v462, %v464
        %v466 = vrot.slane %v465, 4
        %v467 = vadd.f32 %v465, %v466
        %v468 = vrot.slane %v467, 2
        %v469 = vadd.f32 %v467, %v468
        %v470 = vrot.slane %v469, 1
        %v471 = vadd.f32 %v469, %v470
        %v472 = vmul.f32 %v471, 0.027777778
        %v473 = vadd.f32 %v472, 1e-08
        %v474 = vrsqrt.pop %v473
        %v475 = vmul.f32 %v474, 0.16666667
        %v476 = vmul.f32 %v450, %v475
        %v477 = vmul.f32 %v451, %v475
        %v478 = vmul.f32 %v452, %v475
        %v479 = vmul.f32 %v453, %v475
        %v480 = vmul.f32 %v454, %v475
        %v481 = vpack.c.bf16 %v477, %v476
        %v482 = vpack.c.bf16 %v479, %v478
        %v483 = vpack.c.bf16 %v480, %v480
        %s484 = smul.u32 %s28, 128
        %s485 = sshra.s32 %s484, 3
        %s486 = sand.u32 %s484, 7
        %s487 = smul.addr %s485, 4
        %s488 = scalar_lea.vmem %s358, %s487
        %v489 = vld [vmem:[%s488] sm:$0xf]
        %v490 = vld [vmem:[%s488 + $0x4] sm:$0xf]
        %v491 = vld [vmem:[%s488 + $0x8] sm:$0xf]
        %v492 = vld [vmem:[%s488 + $0xc] sm:$0xf]
        %v493 = vld [vmem:[%s488 + $0x10] sm:$0xf]
        %v494 = vld [vmem:[%s488 + $0x14] sm:$0xf]
        %v495 = vld [vmem:[%s488 + $0x18] sm:$0xf]
        %v496 = vld [vmem:[%s488 + $0x1c] sm:$0xf]
        %v497 = vld [vmem:[%s488 + $0x20] sm:$0xf]
        %v498 = vld [vmem:[%s488 + $0x24] sm:$0xf]
        %v499 = vld [vmem:[%s488 + $0x28] sm:$0xf]
        %v500 = vld [vmem:[%s488 + $0x2c] sm:$0xf]
        %v501 = vld [vmem:[%s488 + $0x30] sm:$0xf]
        %v502 = vld [vmem:[%s488 + $0x34] sm:$0xf]
        %v503 = vld [vmem:[%s488 + $0x38] sm:$0xf]
        %v504 = vld [vmem:[%s488 + $0x3c] sm:$0xf]
        %v505 = vld [vmem:[%s488 + $0x40] sm:$0xf]
        %v506 = vld [vmem:[%s488 + $0x44] sm:$0xf]
        %v507 = vld [vmem:[%s488 + $0x48] sm:$0xf]
        %v508 = vld [vmem:[%s488 + $0x4c] sm:$0xf]
        %v509 = vld [vmem:[%s488 + $0x50] sm:$0xf]
        %v510 = vunpack.c.l.bf16 %v489
        %v511 = vunpack.c.l.bf16 %v490
        %v512 = vunpack.c.l.bf16 %v491
        %v513 = vunpack.c.l.bf16 %v492
        %v514 = vunpack.c.l.bf16 %v493
        %v515 = vunpack.c.l.bf16 %v494
        %v516 = vunpack.c.l.bf16 %v495
        %v517 = vunpack.c.l.bf16 %v496
        %v518 = vunpack.c.l.bf16 %v497
        %v519 = vunpack.c.l.bf16 %v498
        %v520 = vunpack.c.l.bf16 %v499
        %v521 = vunpack.c.l.bf16 %v500
        %v522 = vunpack.c.l.bf16 %v501
        %v523 = vunpack.c.l.bf16 %v502
        %v524 = vunpack.c.l.bf16 %v503
        %v525 = vunpack.c.l.bf16 %v504
        %v526 = vunpack.c.l.bf16 %v505
        %v527 = vunpack.c.l.bf16 %v506
        %v528 = vunpack.c.l.bf16 %v507
        %v529 = vunpack.c.l.bf16 %v508
        %v530 = vunpack.c.l.bf16 %v509
        %v531 = vlaneseq
        %v532 = vshrl.u32 %v531, 7
        %v533 = vadd.s32 %v532, 8
        %v534 = vadd.s32 %v532, 16
        %v535 = vadd.s32 %v532, 24
        %v536 = vadd.s32 %v532, 32
        %v537 = vadd.s32 %v532, 40
        %v538 = vadd.s32 %v532, 48
        %v539 = vadd.s32 %v532, 56
        %v540 = vadd.s32 %v532, 64
        %v541 = vadd.s32 %v532, 72
        %v542 = vadd.s32 %v532, 80
        %v543 = vadd.s32 %v532, 88
        %v544 = vadd.s32 %v532, 96
        %v545 = vadd.s32 %v532, 104
        %v546 = vadd.s32 %v532, 112
        %v547 = vadd.s32 %v532, 120
        %vm548 = vcmp.lt.s32.totalorder %v532, 0
        %v549 = vsub.s32 0, %v532
        %v550 = vsel %vm548, %v549, %v532
        %v551 = vshrl.u32 %v550, 4
        %v552 = vand.u32 %v550, 15
        %v553 = vsub.s32 0, %v552
        %v554 = vsel %vm548, %v553, %v552
        %vm555 = vcmp.lt.s32.totalorder %v533, 0
        %v556 = vsub.s32 0, %v533
        %v557 = vsel %vm555, %v556, %v533
        %v558 = vshrl.u32 %v557, 4
        %v559 = vand.u32 %v557, 15
        %v560 = vsub.s32 0, %v559
        %v561 = vsel %vm555, %v560, %v559
        %vm562 = vcmp.lt.s32.totalorder %v534, 0
        %v563 = vsub.s32 0, %v534
        %v564 = vsel %vm562, %v563, %v534
        %v565 = vshrl.u32 %v564, 4
        %v566 = vand.u32 %v564, 15
        %v567 = vsub.s32 0, %v566
        %v568 = vsel %vm562, %v567, %v566
        %vm569 = vcmp.lt.s32.totalorder %v535, 0
        %v570 = vsub.s32 0, %v535
        %v571 = vsel %vm569, %v570, %v535
        %v572 = vshrl.u32 %v571, 4
        %v573 = vand.u32 %v571, 15
        %v574 = vsub.s32 0, %v573
        %v575 = vsel %vm569, %v574, %v573
        %vm576 = vcmp.lt.s32.totalorder %v536, 0
        %v577 = vsub.s32 0, %v536
        %v578 = vsel %vm576, %v577, %v536
        %v579 = vshrl.u32 %v578, 4
        %v580 = vand.u32 %v578, 15
        %v581 = vsub.s32 0, %v580
        %v582 = vsel %vm576, %v581, %v580
        %vm583 = vcmp.lt.s32.totalorder %v537, 0
        %v584 = vsub.s32 0, %v537
        %v585 = vsel %vm583, %v584, %v537
        %v586 = vshrl.u32 %v585, 4
        %v587 = vand.u32 %v585, 15
        %v588 = vsub.s32 0, %v587
        %v589 = vsel %vm583, %v588, %v587
        %vm590 = vcmp.lt.s32.totalorder %v538, 0
        %v591 = vsub.s32 0, %v538
        %v592 = vsel %vm590, %v591, %v538
        %v593 = vshrl.u32 %v592, 4
        %v594 = vand.u32 %v592, 15
        %v595 = vsub.s32 0, %v594
        %v596 = vsel %vm590, %v595, %v594
        %vm597 = vcmp.lt.s32.totalorder %v539, 0
        %v598 = vsub.s32 0, %v539
        %v599 = vsel %vm597, %v598, %v539
        %v600 = vshrl.u32 %v599, 4
        %v601 = vand.u32 %v599, 15
        %v602 = vsub.s32 0, %v601
        %v603 = vsel %vm597, %v602, %v601
        %vm604 = vcmp.lt.s32.totalorder %v540, 0
        %v605 = vsub.s32 0, %v540
        %v606 = vsel %vm604, %v605, %v540
        %v607 = vshrl.u32 %v606, 4
        %v608 = vand.u32 %v606, 15
        %v609 = vsub.s32 0, %v608
        %v610 = vsel %vm604, %v609, %v608
        %vm611 = vcmp.lt.s32.totalorder %v541, 0
        %v612 = vsub.s32 0, %v541
        %v613 = vsel %vm611, %v612, %v541
        %v614 = vshrl.u32 %v613, 4
        %v615 = vand.u32 %v613, 15
        %v616 = vsub.s32 0, %v615
        %v617 = vsel %vm611, %v616, %v615
        %vm618 = vcmp.lt.s32.totalorder %v542, 0
        %v619 = vsub.s32 0, %v542
        %v620 = vsel %vm618, %v619, %v542
        %v621 = vshrl.u32 %v620, 4
        %v622 = vand.u32 %v620, 15
        %v623 = vsub.s32 0, %v622
        %v624 = vsel %vm618, %v623, %v622
        %vm625 = vcmp.lt.s32.totalorder %v543, 0
        %v626 = vsub.s32 0, %v543
        %v627 = vsel %vm625, %v626, %v543
        %v628 = vshrl.u32 %v627, 4
        %v629 = vand.u32 %v627, 15
        %v630 = vsub.s32 0, %v629
        %v631 = vsel %vm625, %v630, %v629
        %vm632 = vcmp.lt.s32.totalorder %v544, 0
        %v633 = vsub.s32 0, %v544
        %v634 = vsel %vm632, %v633, %v544
        %v635 = vshrl.u32 %v634, 4
        %v636 = vand.u32 %v634, 15
        %v637 = vsub.s32 0, %v636
        %v638 = vsel %vm632, %v637, %v636
        %vm639 = vcmp.lt.s32.totalorder %v545, 0
        %v640 = vsub.s32 0, %v545
        %v641 = vsel %vm639, %v640, %v545
        %v642 = vshrl.u32 %v641, 4
        %v643 = vand.u32 %v641, 15
        %v644 = vsub.s32 0, %v643
        %v645 = vsel %vm639, %v644, %v643
        %vm646 = vcmp.lt.s32.totalorder %v546, 0
        %v647 = vsub.s32 0, %v546
        %v648 = vsel %vm646, %v647, %v546
        %v649 = vshrl.u32 %v648, 4
        %v650 = vand.u32 %v648, 15
        %v651 = vsub.s32 0, %v650
        %v652 = vsel %vm646, %v651, %v650
        %vm653 = vcmp.lt.s32.totalorder %v547, 0
        %v654 = vsub.s32 0, %v547
        %v655 = vsel %vm653, %v654, %v547
        %v656 = vshrl.u32 %v655, 4
        %v657 = vand.u32 %v655, 15
        %v658 = vsub.s32 0, %v657
        %v659 = vsel %vm653, %v658, %v657
        %vm660 = vcmp.ne.s32.totalorder %v554, 0
        %vm661 = vcmp.ne.s32.totalorder %v561, 0
        %vm662 = vcmp.ne.s32.totalorder %v568, 0
        %vm663 = vcmp.ne.s32.totalorder %v575, 0
        %vm664 = vcmp.ne.s32.totalorder %v582, 0
        %vm665 = vcmp.ne.s32.totalorder %v589, 0
        %vm666 = vcmp.ne.s32.totalorder %v596, 0
        %vm667 = vcmp.ne.s32.totalorder %v603, 0
        %vm668 = vcmp.ne.s32.totalorder %v610, 0
        %vm669 = vcmp.ne.s32.totalorder %v617, 0
        %vm670 = vcmp.ne.s32.totalorder %v624, 0
        %vm671 = vcmp.ne.s32.totalorder %v631, 0
        %vm672 = vcmp.ne.s32.totalorder %v638, 0
        %vm673 = vcmp.ne.s32.totalorder %v645, 0
        %vm674 = vcmp.ne.s32.totalorder %v652, 0
        %vm675 = vcmp.ne.s32.totalorder %v659, 0
        %vm676 = vcmp.lt.s32.totalorder %v554, 0
        %vm677 = vcmp.lt.s32.totalorder %v561, 0
        %vm678 = vcmp.lt.s32.totalorder %v568, 0
        %vm679 = vcmp.lt.s32.totalorder %v575, 0
        %vm680 = vcmp.lt.s32.totalorder %v582, 0
        %vm681 = vcmp.lt.s32.totalorder %v589, 0
        %vm682 = vcmp.lt.s32.totalorder %v596, 0
        %vm683 = vcmp.lt.s32.totalorder %v603, 0
        %vm684 = vcmp.lt.s32.totalorder %v610, 0
        %vm685 = vcmp.lt.s32.totalorder %v617, 0
        %vm686 = vcmp.lt.s32.totalorder %v624, 0
        %vm687 = vcmp.lt.s32.totalorder %v631, 0
        %vm688 = vcmp.lt.s32.totalorder %v638, 0
        %vm689 = vcmp.lt.s32.totalorder %v645, 0
        %vm690 = vcmp.lt.s32.totalorder %v652, 0
        %vm691 = vcmp.lt.s32.totalorder %v659, 0
        %vm692 = vmand %vm676, %vm660
        %vm693 = vmand %vm677, %vm661
        %vm694 = vmand %vm678, %vm662
        %vm695 = vmand %vm679, %vm663
        %vm696 = vmand %vm680, %vm664
        %vm697 = vmand %vm681, %vm665
        %vm698 = vmand %vm682, %vm666
        %vm699 = vmand %vm683, %vm667
        %vm700 = vmand %vm684, %vm668
        %vm701 = vmand %vm685, %vm669
        %vm702 = vmand %vm686, %vm670
        %vm703 = vmand %vm687, %vm671
        %vm704 = vmand %vm688, %vm672
        %vm705 = vmand %vm689, %vm673
        %vm706 = vmand %vm690, %vm674
        %vm707 = vmand %vm691, %vm675
        %v708 = vadd.s32 %v554, 16
        %v709 = vadd.s32 %v561, 16
        %v710 = vadd.s32 %v568, 16
        %v711 = vadd.s32 %v575, 16
        %v712 = vadd.s32 %v582, 16
        %v713 = vadd.s32 %v589, 16
        %v714 = vadd.s32 %v596, 16
        %v715 = vadd.s32 %v603, 16
        %v716 = vadd.s32 %v610, 16
        %v717 = vadd.s32 %v617, 16
        %v718 = vadd.s32 %v624, 16
        %v719 = vadd.s32 %v631, 16
        %v720 = vadd.s32 %v638, 16
        %v721 = vadd.s32 %v645, 16
        %v722 = vadd.s32 %v652, 16
        %v723 = vadd.s32 %v659, 16
        %v724 = vsel %vm692, %v708, %v554
        %v725 = vsel %vm693, %v709, %v561
        %v726 = vsel %vm694, %v710, %v568
        %v727 = vsel %vm695, %v711, %v575
        %v728 = vsel %vm696, %v712, %v582
        %v729 = vsel %vm697, %v713, %v589
        %v730 = vsel %vm698, %v714, %v596
        %v731 = vsel %vm699, %v715, %v603
        %v732 = vsel %vm700, %v716, %v610
        %v733 = vsel %vm701, %v717, %v617
        %v734 = vsel %vm702, %v718, %v624
        %v735 = vsel %vm703, %v719, %v631
        %v736 = vsel %vm704, %v720, %v638
        %v737 = vsel %vm705, %v721, %v645
        %v738 = vsel %vm706, %v722, %v652
        %v739 = vsel %vm707, %v723, %v659
        %vm740 = vcmp.ge.s32.totalorder %v724, 1
        %vm741 = vcmp.ge.s32.totalorder %v725, 1
        %vm742 = vcmp.ge.s32.totalorder %v726, 1
        %vm743 = vcmp.ge.s32.totalorder %v727, 1
        %vm744 = vcmp.ge.s32.totalorder %v728, 1
        %vm745 = vcmp.ge.s32.totalorder %v729, 1
        %vm746 = vcmp.ge.s32.totalorder %v730, 1
        %vm747 = vcmp.ge.s32.totalorder %v731, 1
        %vm748 = vcmp.ge.s32.totalorder %v732, 1
        %vm749 = vcmp.ge.s32.totalorder %v733, 1
        %vm750 = vcmp.ge.s32.totalorder %v734, 1
        %vm751 = vcmp.ge.s32.totalorder %v735, 1
        %vm752 = vcmp.ge.s32.totalorder %v736, 1
        %vm753 = vcmp.ge.s32.totalorder %v737, 1
        %vm754 = vcmp.ge.s32.totalorder %v738, 1
        %vm755 = vcmp.ge.s32.totalorder %v739, 1
        %v756 = vsel %vm740, 1, 0
        %v757 = vsel %vm741, 1, 0
        %v758 = vsel %vm742, 1, 0
        %v759 = vsel %vm743, 1, 0
        %v760 = vsel %vm744, 1, 0
        %v761 = vsel %vm745, 1, 0
        %v762 = vsel %vm746, 1, 0
        %v763 = vsel %vm747, 1, 0
        %v764 = vsel %vm748, 1, 0
        %v765 = vsel %vm749, 1, 0
        %v766 = vsel %vm750, 1, 0
        %v767 = vsel %vm751, 1, 0
        %v768 = vsel %vm752, 1, 0
        %v769 = vsel %vm753, 1, 0
        %v770 = vsel %vm754, 1, 0
        %v771 = vsel %vm755, 1, 0
        %vm772 = vcmp.eq.s32.totalorder %v756, 1
        %vm773 = vcmp.eq.s32.totalorder %v757, 1
        %vm774 = vcmp.eq.s32.totalorder %v758, 1
        %vm775 = vcmp.eq.s32.totalorder %v759, 1
        %vm776 = vcmp.eq.s32.totalorder %v760, 1
        %vm777 = vcmp.eq.s32.totalorder %v761, 1
        %vm778 = vcmp.eq.s32.totalorder %v762, 1
        %vm779 = vcmp.eq.s32.totalorder %v763, 1
        %vm780 = vcmp.eq.s32.totalorder %v764, 1
        %vm781 = vcmp.eq.s32.totalorder %v765, 1
        %vm782 = vcmp.eq.s32.totalorder %v766, 1
        %vm783 = vcmp.eq.s32.totalorder %v767, 1
        %vm784 = vcmp.eq.s32.totalorder %v768, 1
        %vm785 = vcmp.eq.s32.totalorder %v769, 1
        %vm786 = vcmp.eq.s32.totalorder %v770, 1
        %vm787 = vcmp.eq.s32.totalorder %v771, 1
        %v788 = vsel %vm772, %v510, 0.0
        %v789 = vsel %vm773, %v511, 0.0
        %v790 = vsel %vm774, %v512, 0.0
        %v791 = vsel %vm775, %v513, 0.0
        %v792 = vsel %vm776, %v514, 0.0
        %v793 = vsel %vm777, %v515, 0.0
        %v794 = vsel %vm778, %v516, 0.0
        %v795 = vsel %vm779, %v517, 0.0
        %v796 = vsel %vm780, %v518, 0.0
        %v797 = vsel %vm781, %v519, 0.0
        %v798 = vsel %vm782, %v520, 0.0
        %v799 = vsel %vm783, %v521, 0.0
        %v800 = vsel %vm784, %v522, 0.0
        %v801 = vsel %vm785, %v523, 0.0
        %v802 = vsel %vm786, %v524, 0.0
        %v803 = vsel %vm787, %v525, 0.0
        %vm804 = vcmask 31744
        %805 = vst.msk [vmem:[#allocation2] sm:$0xff] %vm804, %v788
        %806 = vst.msk [vmem:[#allocation2 + $0x8] sm:$0xff] %vm804, %v789
        %807 = vst.msk [vmem:[#allocation2 + $0x10] sm:$0xff] %vm804, %v790
        %808 = vst.msk [vmem:[#allocation2 + $0x18] sm:$0xff] %vm804, %v791
        %809 = vst.msk [vmem:[#allocation2 + $0x20] sm:$0xff] %vm804, %v792
        %810 = vst.msk [vmem:[#allocation2 + $0x28] sm:$0xff] %vm804, %v793
        %811 = vst.msk [vmem:[#allocation2 + $0x30] sm:$0xff] %vm804, %v794
        %812 = vst.msk [vmem:[#allocation2 + $0x38] sm:$0xff] %vm804, %v795
        %813 = vst.msk [vmem:[#allocation2 + $0x40] sm:$0xff] %vm804, %v796
        %814 = vst.msk [vmem:[#allocation2 + $0x48] sm:$0xff] %vm804, %v797
        %815 = vst.msk [vmem:[#allocation2 + $0x50] sm:$0xff] %vm804, %v798
        %816 = vst.msk [vmem:[#allocation2 + $0x58] sm:$0xff] %vm804, %v799
        %817 = vst.msk [vmem:[#allocation2 + $0x60] sm:$0xff] %vm804, %v800
        %818 = vst.msk [vmem:[#allocation2 + $0x68] sm:$0xff] %vm804, %v801
        %819 = vst.msk [vmem:[#allocation2 + $0x70] sm:$0xff] %vm804, %v802
        %820 = vst.msk [vmem:[#allocation2 + $0x78] sm:$0xff] %vm804, %v803
        %838 = vrot.lane.b32.xlu0 %v510, 4
        %v839 = vpop.permute.xlu0 %838
        %840 = vrot.lane.b32.xlu0 %v511, 4
        %v841 = vpop.permute.xlu0 %840
        %842 = vrot.lane.b32.xlu0 %v512, 4
        %v843 = vpop.permute.xlu0 %842
        %844 = vrot.lane.b32.xlu0 %v513, 4
        %v845 = vpop.permute.xlu0 %844
        %846 = vrot.lane.b32.xlu0 %v514, 4
        %v847 = vpop.permute.xlu0 %846
        %848 = vrot.lane.b32.xlu0 %v515, 4
        %v849 = vpop.permute.xlu0 %848
        %850 = vrot.lane.b32.xlu0 %v516, 4
        %v851 = vpop.permute.xlu0 %850
        %852 = vrot.lane.b32.xlu0 %v517, 4
        %v853 = vpop.permute.xlu0 %852
        %854 = vrot.lane.b32.xlu0 %v518, 4
        %v855 = vpop.permute.xlu0 %854
        %856 = vrot.lane.b32.xlu0 %v519, 4
        %v857 = vpop.permute.xlu0 %856
        %858 = vrot.lane.b32.xlu0 %v520, 4
        %v859 = vpop.permute.xlu0 %858
        %860 = vrot.lane.b32.xlu0 %v521, 4
        %v861 = vpop.permute.xlu0 %860
        %862 = vrot.lane.b32.xlu0 %v522, 4
        %v863 = vpop.permute.xlu0 %862
        %864 = vrot.lane.b32.xlu0 %v523, 4
        %v865 = vpop.permute.xlu0 %864
        %866 = vrot.lane.b32.xlu0 %v524, 4
        %v867 = vpop.permute.xlu0 %866
        %868 = vrot.lane.b32.xlu0 %v525, 4
        %v869 = vpop.permute.xlu0 %868
        %870 = vrot.lane.b32.xlu0 %v526, 4
        %v871 = vpop.permute.xlu0 %870
        %vm889 = vcmask 64545
        %890 = vst.msk [vmem:[#allocation2 - $0x1] sm:$0xfe] %vm889, %v839
        %vm891 = vcmask 64544
        %892 = vst.msk [vmem:[#allocation2 + $0x7] sm:$0xff] %vm891, %v841
        %893 = vst.msk [vmem:[#allocation2 + $0xf] sm:$0xff] %vm891, %v843
        %894 = vst.msk [vmem:[#allocation2 + $0x17] sm:$0xff] %vm891, %v845
        %895 = vst.msk [vmem:[#allocation2 + $0x1f] sm:$0xff] %vm891, %v847
        %896 = vst.msk [vmem:[#allocation2 + $0x27] sm:$0xff] %vm891, %v849
        %897 = vst.msk [vmem:[#allocation2 + $0x2f] sm:$0xff] %vm891, %v851
        %898 = vst.msk [vmem:[#allocation2 + $0x37] sm:$0xff] %vm891, %v853
        %899 = vst.msk [vmem:[#allocation2 + $0x3f] sm:$0xff] %vm891, %v855
        %900 = vst.msk [vmem:[#allocation2 + $0x47] sm:$0xff] %vm891, %v857
        %901 = vst.msk [vmem:[#allocation2 + $0x4f] sm:$0xff] %vm891, %v859
        %902 = vst.msk [vmem:[#allocation2 + $0x57] sm:$0xff] %vm891, %v861
        %903 = vst.msk [vmem:[#allocation2 + $0x5f] sm:$0xff] %vm891, %v863
        %904 = vst.msk [vmem:[#allocation2 + $0x67] sm:$0xff] %vm891, %v865
        %905 = vst.msk [vmem:[#allocation2 + $0x6f] sm:$0xff] %vm891, %v867
        %906 = vst.msk [vmem:[#allocation2 + $0x77] sm:$0xff] %vm891, %v869
        %vm907 = vcmask 57376
        %908 = vst.msk [vmem:[#allocation2 + $0x7f] sm:$0x1] %vm907, %v871
        %vm909 = vcmp.lt.s32.totalorder %v724, 15
        %vm910 = vcmp.lt.s32.totalorder %v725, 15
        %vm911 = vcmp.lt.s32.totalorder %v726, 15
        %vm912 = vcmp.lt.s32.totalorder %v727, 15
        %vm913 = vcmp.lt.s32.totalorder %v728, 15
        %vm914 = vcmp.lt.s32.totalorder %v729, 15
        %vm915 = vcmp.lt.s32.totalorder %v730, 15
        %vm916 = vcmp.lt.s32.totalorder %v731, 15
        %vm917 = vcmp.lt.s32.totalorder %v732, 15
        %vm918 = vcmp.lt.s32.totalorder %v733, 15
        %vm919 = vcmp.lt.s32.totalorder %v734, 15
        %vm920 = vcmp.lt.s32.totalorder %v735, 15
        %vm921 = vcmp.lt.s32.totalorder %v736, 15
        %vm922 = vcmp.lt.s32.totalorder %v737, 15
        %vm923 = vcmp.lt.s32.totalorder %v738, 15
        %vm924 = vcmp.lt.s32.totalorder %v739, 15
        %v925 = vsel %vm909, 1, 0
        %v926 = vsel %vm910, 1, 0
        %v927 = vsel %vm911, 1, 0
        %v928 = vsel %vm912, 1, 0
        %v929 = vsel %vm913, 1, 0
        %v930 = vsel %vm914, 1, 0
        %v931 = vsel %vm915, 1, 0
        %v932 = vsel %vm916, 1, 0
        %v933 = vsel %vm917, 1, 0
        %v934 = vsel %vm918, 1, 0
        %v935 = vsel %vm919, 1, 0
        %v936 = vsel %vm920, 1, 0
        %v937 = vsel %vm921, 1, 0
        %v938 = vsel %vm922, 1, 0
        %v939 = vsel %vm923, 1, 0
        %v940 = vsel %vm924, 1, 0
        %vm941 = vcmp.eq.s32.totalorder %v925, 1
        %vm942 = vcmp.eq.s32.totalorder %v926, 1
        %vm943 = vcmp.eq.s32.totalorder %v927, 1
        %vm944 = vcmp.eq.s32.totalorder %v928, 1
        %vm945 = vcmp.eq.s32.totalorder %v929, 1
        %vm946 = vcmp.eq.s32.totalorder %v930, 1
        %vm947 = vcmp.eq.s32.totalorder %v931, 1
        %vm948 = vcmp.eq.s32.totalorder %v932, 1
        %vm949 = vcmp.eq.s32.totalorder %v933, 1
        %vm950 = vcmp.eq.s32.totalorder %v934, 1
        %vm951 = vcmp.eq.s32.totalorder %v935, 1
        %vm952 = vcmp.eq.s32.totalorder %v936, 1
        %vm953 = vcmp.eq.s32.totalorder %v937, 1
        %vm954 = vcmp.eq.s32.totalorder %v938, 1
        %vm955 = vcmp.eq.s32.totalorder %v939, 1
        %vm956 = vcmp.eq.s32.totalorder %v940, 1
        %vm957 = vcmask 1045504
        %v958 = vrot.slane %v510, 2
        %v959 = vrot.slane %v511, 2
        %v960 = vsel %vm957, %v958, %v959
        %v961 = vrot.slane %v512, 2
        %v962 = vsel %vm957, %v959, %v961
        %v963 = vrot.slane %v513, 2
        %v964 = vsel %vm957, %v961, %v963
        %v965 = vrot.slane %v514, 2
        %v966 = vsel %vm957, %v963, %v965
        %v967 = vrot.slane %v515, 2
        %v968 = vsel %vm957, %v965, %v967
        %v969 = vrot.slane %v516, 2
        %v970 = vsel %vm957, %v967, %v969
        %v971 = vrot.slane %v517, 2
        %v972 = vsel %vm957, %v969, %v971
        %v973 = vrot.slane %v518, 2
        %v974 = vsel %vm957, %v971, %v973
        %v975 = vrot.slane %v519, 2
        %v976 = vsel %vm957, %v973, %v975
        %v977 = vrot.slane %v520, 2
        %v978 = vsel %vm957, %v975, %v977
        %v979 = vrot.slane %v521, 2
        %v980 = vsel %vm957, %v977, %v979
        %v981 = vrot.slane %v522, 2
        %v982 = vsel %vm957, %v979, %v981
        %v983 = vrot.slane %v523, 2
        %v984 = vsel %vm957, %v981, %v983
        %v985 = vrot.slane %v524, 2
        %v986 = vsel %vm957, %v983, %v985
        %v987 = vrot.slane %v525, 2
        %v988 = vsel %vm957, %v985, %v987
        %v989 = vrot.slane %v526, 2
        %v990 = vsel %vm957, %v987, %v989
        %v1007 = vsel %vm941, %v960, 0.0
        %v1008 = vsel %vm942, %v962, 0.0
        %v1009 = vsel %vm943, %v964, 0.0
        %v1010 = vsel %vm944, %v966, 0.0
        %v1011 = vsel %vm945, %v968, 0.0
        %v1012 = vsel %vm946, %v970, 0.0
        %v1013 = vsel %vm947, %v972, 0.0
        %v1014 = vsel %vm948, %v974, 0.0
        %v1015 = vsel %vm949, %v976, 0.0
        %v1016 = vsel %vm950, %v978, 0.0
        %v1017 = vsel %vm951, %v980, 0.0
        %v1018 = vsel %vm952, %v982, 0.0
        %v1019 = vsel %vm953, %v984, 0.0
        %v1020 = vsel %vm954, %v986, 0.0
        %v1021 = vsel %vm955, %v988, 0.0
        %v1022 = vsel %vm956, %v990, 0.0
        %1039 = vrot.lane.b32.xlu0 %v1007, 8
        %v1040 = vpop.permute.xlu0 %1039
        %1041 = vrot.lane.b32.xlu0 %v1008, 8
        %v1042 = vpop.permute.xlu0 %1041
        %1043 = vrot.lane.b32.xlu0 %v1009, 8
        %v1044 = vpop.permute.xlu0 %1043
        %1045 = vrot.lane.b32.xlu0 %v1010, 8
        %v1046 = vpop.permute.xlu0 %1045
        %1047 = vrot.lane.b32.xlu0 %v1011, 8
        %v1048 = vpop.permute.xlu0 %1047
        %1049 = vrot.lane.b32.xlu0 %v1012, 8
        %v1050 = vpop.permute.xlu0 %1049
        %1051 = vrot.lane.b32.xlu0 %v1013, 8
        %v1052 = vpop.permute.xlu0 %1051
        %1053 = vrot.lane.b32.xlu0 %v1014, 8
        %v1054 = vpop.permute.xlu0 %1053
        %1055 = vrot.lane.b32.xlu0 %v1015, 8
        %v1056 = vpop.permute.xlu0 %1055
        %1057 = vrot.lane.b32.xlu0 %v1016, 8
        %v1058 = vpop.permute.xlu0 %1057
        %1059 = vrot.lane.b32.xlu0 %v1017, 8
        %v1060 = vpop.permute.xlu0 %1059
        %1061 = vrot.lane.b32.xlu0 %v1018, 8
        %v1062 = vpop.permute.xlu0 %1061
        %1063 = vrot.lane.b32.xlu0 %v1019, 8
        %v1064 = vpop.permute.xlu0 %1063
        %1065 = vrot.lane.b32.xlu0 %v1020, 8
        %v1066 = vpop.permute.xlu0 %1065
        %1067 = vrot.lane.b32.xlu0 %v1021, 8
        %v1068 = vpop.permute.xlu0 %1067
        %1069 = vrot.lane.b32.xlu0 %v1022, 8
        %v1070 = vpop.permute.xlu0 %1069
        %vm1087 = vcmask 97344
        %1088 = vst.msk [vmem:[#allocation2] sm:$0xff] %vm1087, %v1040
        %1089 = vst.msk [vmem:[#allocation2 + $0x8] sm:$0xff] %vm1087, %v1042
        %1090 = vst.msk [vmem:[#allocation2 + $0x10] sm:$0xff] %vm1087, %v1044
        %1091 = vst.msk [vmem:[#allocation2 + $0x18] sm:$0xff] %vm1087, %v1046
        %1092 = vst.msk [vmem:[#allocation2 + $0x20] sm:$0xff] %vm1087, %v1048
        %1093 = vst.msk [vmem:[#allocation2 + $0x28] sm:$0xff] %vm1087, %v1050
        %1094 = vst.msk [vmem:[#allocation2 + $0x30] sm:$0xff] %vm1087, %v1052
        %1095 = vst.msk [vmem:[#allocation2 + $0x38] sm:$0xff] %vm1087, %v1054
        %1096 = vst.msk [vmem:[#allocation2 + $0x40] sm:$0xff] %vm1087, %v1056
        %1097 = vst.msk [vmem:[#allocation2 + $0x48] sm:$0xff] %vm1087, %v1058
        %1098 = vst.msk [vmem:[#allocation2 + $0x50] sm:$0xff] %vm1087, %v1060
        %1099 = vst.msk [vmem:[#allocation2 + $0x58] sm:$0xff] %vm1087, %v1062
        %1100 = vst.msk [vmem:[#allocation2 + $0x60] sm:$0xff] %vm1087, %v1064
        %1101 = vst.msk [vmem:[#allocation2 + $0x68] sm:$0xff] %vm1087, %v1066
        %1102 = vst.msk [vmem:[#allocation2 + $0x70] sm:$0xff] %vm1087, %v1068
        %1103 = vst.msk [vmem:[#allocation2 + $0x78] sm:$0xff] %vm1087, %v1070
        %v1104 = vsel %vm772, %v512, 0.0
        %v1105 = vsel %vm773, %v513, 0.0
        %v1106 = vsel %vm774, %v514, 0.0
        %v1107 = vsel %vm775, %v515, 0.0
        %v1108 = vsel %vm776, %v516, 0.0
        %v1109 = vsel %vm777, %v517, 0.0
        %v1110 = vsel %vm778, %v518, 0.0
        %v1111 = vsel %vm779, %v519, 0.0
        %v1112 = vsel %vm780, %v520, 0.0
        %v1113 = vsel %vm781, %v521, 0.0
        %v1114 = vsel %vm782, %v522, 0.0
        %v1115 = vsel %vm783, %v523, 0.0
        %v1116 = vsel %vm784, %v524, 0.0
        %v1117 = vsel %vm785, %v525, 0.0
        %v1118 = vsel %vm786, %v526, 0.0
        %v1119 = vsel %vm787, %v527, 0.0
        %1136 = vrot.lane.b32.xlu0 %v1104, 12
        %v1137 = vpop.permute.xlu0 %1136
        %1138 = vrot.lane.b32.xlu0 %v1105, 12
        %v1139 = vpop.permute.xlu0 %1138
        %1140 = vrot.lane.b32.xlu0 %v1106, 12
        %v1141 = vpop.permute.xlu0 %1140
        %1142 = vrot.lane.b32.xlu0 %v1107, 12
        %v1143 = vpop.permute.xlu0 %1142
        %1144 = vrot.lane.b32.xlu0 %v1108, 12
        %v1145 = vpop.permute.xlu0 %1144
        %1146 = vrot.lane.b32.xlu0 %v1109, 12
        %v1147 = vpop.permute.xlu0 %1146
        %1148 = vrot.lane.b32.xlu0 %v1110, 12
        %v1149 = vpop.permute.xlu0 %1148
        %1150 = vrot.lane.b32.xlu0 %v1111, 12
        %v1151 = vpop.permute.xlu0 %1150
        %1152 = vrot.lane.b32.xlu0 %v1112, 12
        %v1153 = vpop.permute.xlu0 %1152
        %1154 = vrot.lane.b32.xlu0 %v1113, 12
        %v1155 = vpop.permute.xlu0 %1154
        %1156 = vrot.lane.b32.xlu0 %v1114, 12
        %v1157 = vpop.permute.xlu0 %1156
        %1158 = vrot.lane.b32.xlu0 %v1115, 12
        %v1159 = vpop.permute.xlu0 %1158
        %1160 = vrot.lane.b32.xlu0 %v1116, 12
        %v1161 = vpop.permute.xlu0 %1160
        %1162 = vrot.lane.b32.xlu0 %v1117, 12
        %v1163 = vpop.permute.xlu0 %1162
        %1164 = vrot.lane.b32.xlu0 %v1118, 12
        %v1165 = vpop.permute.xlu0 %1164
        %1166 = vrot.lane.b32.xlu0 %v1119, 12
        %v1167 = vpop.permute.xlu0 %1166
        %vm1184 = vcmask 130144
        %1185 = vst.msk [vmem:[#allocation2] sm:$0xff] %vm1184, %v1137
        %1186 = vst.msk [vmem:[#allocation2 + $0x8] sm:$0xff] %vm1184, %v1139
        %1187 = vst.msk [vmem:[#allocation2 + $0x10] sm:$0xff] %vm1184, %v1141
        %1188 = vst.msk [vmem:[#allocation2 + $0x18] sm:$0xff] %vm1184, %v1143
        %1189 = vst.msk [vmem:[#allocation2 + $0x20] sm:$0xff] %vm1184, %v1145
        %1190 = vst.msk [vmem:[#allocation2 + $0x28] sm:$0xff] %vm1184, %v1147
        %1191 = vst.msk [vmem:[#allocation2 + $0x30] sm:$0xff] %vm1184, %v1149
        %1192 = vst.msk [vmem:[#allocation2 + $0x38] sm:$0xff] %vm1184, %v1151
        %1193 = vst.msk [vmem:[#allocation2 + $0x40] sm:$0xff] %vm1184, %v1153
        %1194 = vst.msk [vmem:[#allocation2 + $0x48] sm:$0xff] %vm1184, %v1155
        %1195 = vst.msk [vmem:[#allocation2 + $0x50] sm:$0xff] %vm1184, %v1157
        %1196 = vst.msk [vmem:[#allocation2 + $0x58] sm:$0xff] %vm1184, %v1159
        %1197 = vst.msk [vmem:[#allocation2 + $0x60] sm:$0xff] %vm1184, %v1161
        %1198 = vst.msk [vmem:[#allocation2 + $0x68] sm:$0xff] %vm1184, %v1163
        %1199 = vst.msk [vmem:[#allocation2 + $0x70] sm:$0xff] %vm1184, %v1165
        %1200 = vst.msk [vmem:[#allocation2 + $0x78] sm:$0xff] %vm1184, %v1167
        %1203 = vrot.lane.b32.xlu0 %v512, 16
        %v1204 = vpop.permute.xlu0 %1203
        %1205 = vrot.lane.b32.xlu0 %v513, 16
        %v1206 = vpop.permute.xlu0 %1205
        %1207 = vrot.lane.b32.xlu0 %v514, 16
        %v1208 = vpop.permute.xlu0 %1207
        %1209 = vrot.lane.b32.xlu0 %v515, 16
        %v1210 = vpop.permute.xlu0 %1209
        %1211 = vrot.lane.b32.xlu0 %v516, 16
        %v1212 = vpop.permute.xlu0 %1211
        %1213 = vrot.lane.b32.xlu0 %v517, 16
        %v1214 = vpop.permute.xlu0 %1213
        %1215 = vrot.lane.b32.xlu0 %v518, 16
        %v1216 = vpop.permute.xlu0 %1215
        %1217 = vrot.lane.b32.xlu0 %v519, 16
        %v1218 = vpop.permute.xlu0 %1217
        %1219 = vrot.lane.b32.xlu0 %v520, 16
        %v1220 = vpop.permute.xlu0 %1219
        %1221 = vrot.lane.b32.xlu0 %v521, 16
        %v1222 = vpop.permute.xlu0 %1221
        %1223 = vrot.lane.b32.xlu0 %v522, 16
        %v1224 = vpop.permute.xlu0 %1223
        %1225 = vrot.lane.b32.xlu0 %v523, 16
        %v1226 = vpop.permute.xlu0 %1225
        %1227 = vrot.lane.b32.xlu0 %v524, 16
        %v1228 = vpop.permute.xlu0 %1227
        %1229 = vrot.lane.b32.xlu0 %v525, 16
        %v1230 = vpop.permute.xlu0 %1229
        %1231 = vrot.lane.b32.xlu0 %v526, 16
        %v1232 = vpop.permute.xlu0 %1231
        %1233 = vrot.lane.b32.xlu0 %v527, 16
        %v1234 = vpop.permute.xlu0 %1233
        %1235 = vrot.lane.b32.xlu0 %v528, 16
        %v1236 = vpop.permute.xlu0 %1235
        %vm1254 = vcmask 162945
        %1255 = vst.msk [vmem:[#allocation2 - $0x1] sm:$0xfe] %vm1254, %v1204
        %vm1256 = vcmask 162944
        %1257 = vst.msk [vmem:[#allocation2 + $0x7] sm:$0xff] %vm1256, %v1206
        %1258 = vst.msk [vmem:[#allocation2 + $0xf] sm:$0xff] %vm1256, %v1208
        %1259 = vst.msk [vmem:[#allocation2 + $0x17] sm:$0xff] %vm1256, %v1210
        %1260 = vst.msk [vmem:[#allocation2 + $0x1f] sm:$0xff] %vm1256, %v1212
        %1261 = vst.msk [vmem:[#allocation2 + $0x27] sm:$0xff] %vm1256, %v1214
        %1262 = vst.msk [vmem:[#allocation2 + $0x2f] sm:$0xff] %vm1256, %v1216
        %1263 = vst.msk [vmem:[#allocation2 + $0x37] sm:$0xff] %vm1256, %v1218
        %1264 = vst.msk [vmem:[#allocation2 + $0x3f] sm:$0xff] %vm1256, %v1220
        %1265 = vst.msk [vmem:[#allocation2 + $0x47] sm:$0xff] %vm1256, %v1222
        %1266 = vst.msk [vmem:[#allocation2 + $0x4f] sm:$0xff] %vm1256, %v1224
        %1267 = vst.msk [vmem:[#allocation2 + $0x57] sm:$0xff] %vm1256, %v1226
        %1268 = vst.msk [vmem:[#allocation2 + $0x5f] sm:$0xff] %vm1256, %v1228
        %1269 = vst.msk [vmem:[#allocation2 + $0x67] sm:$0xff] %vm1256, %v1230
        %1270 = vst.msk [vmem:[#allocation2 + $0x6f] sm:$0xff] %vm1256, %v1232
        %1271 = vst.msk [vmem:[#allocation2 + $0x77] sm:$0xff] %vm1256, %v1234
        %vm1272 = vcmask 155776
        %1273 = vst.msk [vmem:[#allocation2 + $0x7f] sm:$0x1] %vm1272, %v1236
        %v1274 = vrot.slane %v527, 2
        %v1275 = vsel %vm957, %v989, %v1274
        %v1276 = vrot.slane %v528, 2
        %v1277 = vsel %vm957, %v1274, %v1276
        %v1280 = vsel %vm941, %v964, 0.0
        %v1281 = vsel %vm942, %v966, 0.0
        %v1282 = vsel %vm943, %v968, 0.0
        %v1283 = vsel %vm944, %v970, 0.0
        %v1284 = vsel %vm945, %v972, 0.0
        %v1285 = vsel %vm946, %v974, 0.0
        %v1286 = vsel %vm947, %v976, 0.0
        %v1287 = vsel %vm948, %v978, 0.0
        %v1288 = vsel %vm949, %v980, 0.0
        %v1289 = vsel %vm950, %v982, 0.0
        %v1290 = vsel %vm951, %v984, 0.0
        %v1291 = vsel %vm952, %v986, 0.0
        %v1292 = vsel %vm953, %v988, 0.0
        %v1293 = vsel %vm954, %v990, 0.0
        %v1294 = vsel %vm955, %v1275, 0.0
        %v1295 = vsel %vm956, %v1277, 0.0
        %1312 = vrot.lane.b32.xlu0 %v1280, 20
        %v1313 = vpop.permute.xlu0 %1312
        %1314 = vrot.lane.b32.xlu0 %v1281, 20
        %v1315 = vpop.permute.xlu0 %1314
        %1316 = vrot.lane.b32.xlu0 %v1282, 20
        %v1317 = vpop.permute.xlu0 %1316
        %1318 = vrot.lane.b32.xlu0 %v1283, 20
        %v1319 = vpop.permute.xlu0 %1318
        %1320 = vrot.lane.b32.xlu0 %v1284, 20
        %v1321 = vpop.permute.xlu0 %1320
        %1322 = vrot.lane.b32.xlu0 %v1285, 20
        %v1323 = vpop.permute.xlu0 %1322
        %1324 = vrot.lane.b32.xlu0 %v1286, 20
        %v1325 = vpop.permute.xlu0 %1324
        %1326 = vrot.lane.b32.xlu0 %v1287, 20
        %v1327 = vpop.permute.xlu0 %1326
        %1328 = vrot.lane.b32.xlu0 %v1288, 20
        %v1329 = vpop.permute.xlu0 %1328
        %1330 = vrot.lane.b32.xlu0 %v1289, 20
        %v1331 = vpop.permute.xlu0 %1330
        %1332 = vrot.lane.b32.xlu0 %v1290, 20
        %v1333 = vpop.permute.xlu0 %1332
        %1334 = vrot.lane.b32.xlu0 %v1291, 20
        %v1335 = vpop.permute.xlu0 %1334
        %1336 = vrot.lane.b32.xlu0 %v1292, 20
        %v1337 = vpop.permute.xlu0 %1336
        %1338 = vrot.lane.b32.xlu0 %v1293, 20
        %v1339 = vpop.permute.xlu0 %1338
        %1340 = vrot.lane.b32.xlu0 %v1294, 20
        %v1341 = vpop.permute.xlu0 %1340
        %1342 = vrot.lane.b32.xlu0 %v1295, 20
        %v1343 = vpop.permute.xlu0 %1342
        %vm1360 = vcmask 195744
        %1361 = vst.msk [vmem:[#allocation2] sm:$0xff] %vm1360, %v1313
        %1362 = vst.msk [vmem:[#allocation2 + $0x8] sm:$0xff] %vm1360, %v1315
        %1363 = vst.msk [vmem:[#allocation2 + $0x10] sm:$0xff] %vm1360, %v1317
        %1364 = vst.msk [vmem:[#allocation2 + $0x18] sm:$0xff] %vm1360, %v1319
        %1365 = vst.msk [vmem:[#allocation2 + $0x20] sm:$0xff] %vm1360, %v1321
        %1366 = vst.msk [vmem:[#allocation2 + $0x28] sm:$0xff] %vm1360, %v1323
        %1367 = vst.msk [vmem:[#allocation2 + $0x30] sm:$0xff] %vm1360, %v1325
        %1368 = vst.msk [vmem:[#allocation2 + $0x38] sm:$0xff] %vm1360, %v1327
        %1369 = vst.msk [vmem:[#allocation2 + $0x40] sm:$0xff] %vm1360, %v1329
        %1370 = vst.msk [vmem:[#allocation2 + $0x48] sm:$0xff] %vm1360, %v1331
        %1371 = vst.msk [vmem:[#allocation2 + $0x50] sm:$0xff] %vm1360, %v1333
        %1372 = vst.msk [vmem:[#allocation2 + $0x58] sm:$0xff] %vm1360, %v1335
        %1373 = vst.msk [vmem:[#allocation2 + $0x60] sm:$0xff] %vm1360, %v1337
        %1374 = vst.msk [vmem:[#allocation2 + $0x68] sm:$0xff] %vm1360, %v1339
        %1375 = vst.msk [vmem:[#allocation2 + $0x70] sm:$0xff] %vm1360, %v1341
        %1376 = vst.msk [vmem:[#allocation2 + $0x78] sm:$0xff] %vm1360, %v1343
        %v1377 = vsel %vm772, %v514, 0.0
        %v1378 = vsel %vm773, %v515, 0.0
        %v1379 = vsel %vm774, %v516, 0.0
        %v1380 = vsel %vm775, %v517, 0.0
        %v1381 = vsel %vm776, %v518, 0.0
        %v1382 = vsel %vm777, %v519, 0.0
        %v1383 = vsel %vm778, %v520, 0.0
        %v1384 = vsel %vm779, %v521, 0.0
        %v1385 = vsel %vm780, %v522, 0.0
        %v1386 = vsel %vm781, %v523, 0.0
        %v1387 = vsel %vm782, %v524, 0.0
        %v1388 = vsel %vm783, %v525, 0.0
        %v1389 = vsel %vm784, %v526, 0.0
        %v1390 = vsel %vm785, %v527, 0.0
        %v1391 = vsel %vm786, %v528, 0.0
        %v1392 = vsel %vm787, %v529, 0.0
        %1409 = vrot.lane.b32.xlu0 %v1377, 24
        %v1410 = vpop.permute.xlu0 %1409
        %1411 = vrot.lane.b32.xlu0 %v1378, 24
        %v1412 = vpop.permute.xlu0 %1411
        %1413 = vrot.lane.b32.xlu0 %v1379, 24
        %v1414 = vpop.permute.xlu0 %1413
        %1415 = vrot.lane.b32.xlu0 %v1380, 24
        %v1416 = vpop.permute.xlu0 %1415
        %1417 = vrot.lane.b32.xlu0 %v1381, 24
        %v1418 = vpop.permute.xlu0 %1417
        %1419 = vrot.lane.b32.xlu0 %v1382, 24
        %v1420 = vpop.permute.xlu0 %1419
        %1421 = vrot.lane.b32.xlu0 %v1383, 24
        %v1422 = vpop.permute.xlu0 %1421
        %1423 = vrot.lane.b32.xlu0 %v1384, 24
        %v1424 = vpop.permute.xlu0 %1423
        %1425 = vrot.lane.b32.xlu0 %v1385, 24
        %v1426 = vpop.permute.xlu0 %1425
        %1427 = vrot.lane.b32.xlu0 %v1386, 24
        %v1428 = vpop.permute.xlu0 %1427
        %1429 = vrot.lane.b32.xlu0 %v1387, 24
        %v1430 = vpop.permute.xlu0 %1429
        %1431 = vrot.lane.b32.xlu0 %v1388, 24
        %v1432 = vpop.permute.xlu0 %1431
        %1433 = vrot.lane.b32.xlu0 %v1389, 24
        %v1434 = vpop.permute.xlu0 %1433
        %1435 = vrot.lane.b32.xlu0 %v1390, 24
        %v1436 = vpop.permute.xlu0 %1435
        %1437 = vrot.lane.b32.xlu0 %v1391, 24
        %v1438 = vpop.permute.xlu0 %1437
        %1439 = vrot.lane.b32.xlu0 %v1392, 24
        %v1440 = vpop.permute.xlu0 %1439
        %vm1457 = vcmask 228544
        %1458 = vst.msk [vmem:[#allocation2] sm:$0xff] %vm1457, %v1410
        %1459 = vst.msk [vmem:[#allocation2 + $0x8] sm:$0xff] %vm1457, %v1412
        %1460 = vst.msk [vmem:[#allocation2 + $0x10] sm:$0xff] %vm1457, %v1414
        %1461 = vst.msk [vmem:[#allocation2 + $0x18] sm:$0xff] %vm1457, %v1416
        %1462 = vst.msk [vmem:[#allocation2 + $0x20] sm:$0xff] %vm1457, %v1418
        %1463 = vst.msk [vmem:[#allocation2 + $0x28] sm:$0xff] %vm1457, %v1420
        %1464 = vst.msk [vmem:[#allocation2 + $0x30] sm:$0xff] %vm1457, %v1422
        %1465 = vst.msk [vmem:[#allocation2 + $0x38] sm:$0xff] %vm1457, %v1424
        %1466 = vst.msk [vmem:[#allocation2 + $0x40] sm:$0xff] %vm1457, %v1426
        %1467 = vst.msk [vmem:[#allocation2 + $0x48] sm:$0xff] %vm1457, %v1428
        %1468 = vst.msk [vmem:[#allocation2 + $0x50] sm:$0xff] %vm1457, %v1430
        %1469 = vst.msk [vmem:[#allocation2 + $0x58] sm:$0xff] %vm1457, %v1432
        %1470 = vst.msk [vmem:[#allocation2 + $0x60] sm:$0xff] %vm1457, %v1434
        %1471 = vst.msk [vmem:[#allocation2 + $0x68] sm:$0xff] %vm1457, %v1436
        %1472 = vst.msk [vmem:[#allocation2 + $0x70] sm:$0xff] %vm1457, %v1438
        %1473 = vst.msk [vmem:[#allocation2 + $0x78] sm:$0xff] %vm1457, %v1440
        %1476 = vrot.lane.b32.xlu0 %v514, 28
        %v1477 = vpop.permute.xlu0 %1476
        %1478 = vrot.lane.b32.xlu0 %v515, 28
        %v1479 = vpop.permute.xlu0 %1478
        %1480 = vrot.lane.b32.xlu0 %v516, 28
        %v1481 = vpop.permute.xlu0 %1480
        %1482 = vrot.lane.b32.xlu0 %v517, 28
        %v1483 = vpop.permute.xlu0 %1482
        %1484 = vrot.lane.b32.xlu0 %v518, 28
        %v1485 = vpop.permute.xlu0 %1484
        %1486 = vrot.lane.b32.xlu0 %v519, 28
        %v1487 = vpop.permute.xlu0 %1486
        %1488 = vrot.lane.b32.xlu0 %v520, 28
        %v1489 = vpop.permute.xlu0 %1488
        %1490 = vrot.lane.b32.xlu0 %v521, 28
        %v1491 = vpop.permute.xlu0 %1490
        %1492 = vrot.lane.b32.xlu0 %v522, 28
        %v1493 = vpop.permute.xlu0 %1492
        %1494 = vrot.lane.b32.xlu0 %v523, 28
        %v1495 = vpop.permute.xlu0 %1494
        %1496 = vrot.lane.b32.xlu0 %v524, 28
        %v1497 = vpop.permute.xlu0 %1496
        %1498 = vrot.lane.b32.xlu0 %v525, 28
        %v1499 = vpop.permute.xlu0 %1498
        %1500 = vrot.lane.b32.xlu0 %v526, 28
        %v1501 = vpop.permute.xlu0 %1500
        %1502 = vrot.lane.b32.xlu0 %v527, 28
        %v1503 = vpop.permute.xlu0 %1502
        %1504 = vrot.lane.b32.xlu0 %v528, 28
        %v1505 = vpop.permute.xlu0 %1504
        %1506 = vrot.lane.b32.xlu0 %v529, 28
        %v1507 = vpop.permute.xlu0 %1506
        %1508 = vrot.lane.b32.xlu0 %v530, 28
        %v1509 = vpop.permute.xlu0 %1508
        %vm1527 = vcmask 261345
        %1528 = vst.msk [vmem:[#allocation2 - $0x1] sm:$0xfe] %vm1527, %v1477
        %vm1529 = vcmask 261344
        %1530 = vst.msk [vmem:[#allocation2 + $0x7] sm:$0xff] %vm1529, %v1479
        %1531 = vst.msk [vmem:[#allocation2 + $0xf] sm:$0xff] %vm1529, %v1481
        %1532 = vst.msk [vmem:[#allocation2 + $0x17] sm:$0xff] %vm1529, %v1483
        %1533 = vst.msk [vmem:[#allocation2 + $0x1f] sm:$0xff] %vm1529, %v1485
        %1534 = vst.msk [vmem:[#allocation2 + $0x27] sm:$0xff] %vm1529, %v1487
        %1535 = vst.msk [vmem:[#allocation2 + $0x2f] sm:$0xff] %vm1529, %v1489
        %1536 = vst.msk [vmem:[#allocation2 + $0x37] sm:$0xff] %vm1529, %v1491
        %1537 = vst.msk [vmem:[#allocation2 + $0x3f] sm:$0xff] %vm1529, %v1493
        %1538 = vst.msk [vmem:[#allocation2 + $0x47] sm:$0xff] %vm1529, %v1495
        %1539 = vst.msk [vmem:[#allocation2 + $0x4f] sm:$0xff] %vm1529, %v1497
        %1540 = vst.msk [vmem:[#allocation2 + $0x57] sm:$0xff] %vm1529, %v1499
        %1541 = vst.msk [vmem:[#allocation2 + $0x5f] sm:$0xff] %vm1529, %v1501
        %1542 = vst.msk [vmem:[#allocation2 + $0x67] sm:$0xff] %vm1529, %v1503
        %1543 = vst.msk [vmem:[#allocation2 + $0x6f] sm:$0xff] %vm1529, %v1505
        %1544 = vst.msk [vmem:[#allocation2 + $0x77] sm:$0xff] %vm1529, %v1507
        %vm1545 = vcmask 254176
        %1546 = vst.msk [vmem:[#allocation2 + $0x7f] sm:$0x1] %vm1545, %v1509
        %v1547 = vrot.slane %v529, 2
        %v1548 = vsel %vm957, %v1276, %v1547
        %v1549 = vrot.slane %v530, 2
        %v1550 = vsel %vm957, %v1547, %v1549
        %v1553 = vsel %vm941, %v968, 0.0
        %v1554 = vsel %vm942, %v970, 0.0
        %v1555 = vsel %vm943, %v972, 0.0
        %v1556 = vsel %vm944, %v974, 0.0
        %v1557 = vsel %vm945, %v976, 0.0
        %v1558 = vsel %vm946, %v978, 0.0
        %v1559 = vsel %vm947, %v980, 0.0
        %v1560 = vsel %vm948, %v982, 0.0
        %v1561 = vsel %vm949, %v984, 0.0
        %v1562 = vsel %vm950, %v986, 0.0
        %v1563 = vsel %vm951, %v988, 0.0
        %v1564 = vsel %vm952, %v990, 0.0
        %v1565 = vsel %vm953, %v1275, 0.0
        %v1566 = vsel %vm954, %v1277, 0.0
        %v1567 = vsel %vm955, %v1548, 0.0
        %v1568 = vsel %vm956, %v1550, 0.0
        %1585 = vrot.lane.b32.xlu0 %v1553, 32
        %v1586 = vpop.permute.xlu0 %1585
        %1587 = vrot.lane.b32.xlu0 %v1554, 32
        %v1588 = vpop.permute.xlu0 %1587
        %1589 = vrot.lane.b32.xlu0 %v1555, 32
        %v1590 = vpop.permute.xlu0 %1589
        %1591 = vrot.lane.b32.xlu0 %v1556, 32
        %v1592 = vpop.permute.xlu0 %1591
        %1593 = vrot.lane.b32.xlu0 %v1557, 32
        %v1594 = vpop.permute.xlu0 %1593
        %1595 = vrot.lane.b32.xlu0 %v1558, 32
        %v1596 = vpop.permute.xlu0 %1595
        %1597 = vrot.lane.b32.xlu0 %v1559, 32
        %v1598 = vpop.permute.xlu0 %1597
        %1599 = vrot.lane.b32.xlu0 %v1560, 32
        %v1600 = vpop.permute.xlu0 %1599
        %1601 = vrot.lane.b32.xlu0 %v1561, 32
        %v1602 = vpop.permute.xlu0 %1601
        %1603 = vrot.lane.b32.xlu0 %v1562, 32
        %v1604 = vpop.permute.xlu0 %1603
        %1605 = vrot.lane.b32.xlu0 %v1563, 32
        %v1606 = vpop.permute.xlu0 %1605
        %1607 = vrot.lane.b32.xlu0 %v1564, 32
        %v1608 = vpop.permute.xlu0 %1607
        %1609 = vrot.lane.b32.xlu0 %v1565, 32
        %v1610 = vpop.permute.xlu0 %1609
        %1611 = vrot.lane.b32.xlu0 %v1566, 32
        %v1612 = vpop.permute.xlu0 %1611
        %1613 = vrot.lane.b32.xlu0 %v1567, 32
        %v1614 = vpop.permute.xlu0 %1613
        %1615 = vrot.lane.b32.xlu0 %v1568, 32
        %v1616 = vpop.permute.xlu0 %1615
        %vm1633 = vcmask 294144
        %1634 = vst.msk [vmem:[#allocation2] sm:$0xff] %vm1633, %v1586
        %1635 = vst.msk [vmem:[#allocation2 + $0x8] sm:$0xff] %vm1633, %v1588
        %1636 = vst.msk [vmem:[#allocation2 + $0x10] sm:$0xff] %vm1633, %v1590
        %1637 = vst.msk [vmem:[#allocation2 + $0x18] sm:$0xff] %vm1633, %v1592
        %1638 = vst.msk [vmem:[#allocation2 + $0x20] sm:$0xff] %vm1633, %v1594
        %1639 = vst.msk [vmem:[#allocation2 + $0x28] sm:$0xff] %vm1633, %v1596
        %1640 = vst.msk [vmem:[#allocation2 + $0x30] sm:$0xff] %vm1633, %v1598
        %1641 = vst.msk [vmem:[#allocation2 + $0x38] sm:$0xff] %vm1633, %v1600
        %1642 = vst.msk [vmem:[#allocation2 + $0x40] sm:$0xff] %vm1633, %v1602
        %1643 = vst.msk [vmem:[#allocation2 + $0x48] sm:$0xff] %vm1633, %v1604
        %1644 = vst.msk [vmem:[#allocation2 + $0x50] sm:$0xff] %vm1633, %v1606
        %1645 = vst.msk [vmem:[#allocation2 + $0x58] sm:$0xff] %vm1633, %v1608
        %1646 = vst.msk [vmem:[#allocation2 + $0x60] sm:$0xff] %vm1633, %v1610
        %1647 = vst.msk [vmem:[#allocation2 + $0x68] sm:$0xff] %vm1633, %v1612
        %1648 = vst.msk [vmem:[#allocation2 + $0x70] sm:$0xff] %vm1633, %v1614
        %1649 = vst.msk [vmem:[#allocation2 + $0x78] sm:$0xff] %vm1633, %v1616
        %v1650 = vld [vmem:[#allocation2] sm:$0xff]
        %v1651 = vld [vmem:[#allocation2 + $0x8] sm:$0xff]
        %v1652 = vld [vmem:[#allocation2 + $0x10] sm:$0xff]
        %v1653 = vld [vmem:[#allocation2 + $0x18] sm:$0xff]
        %v1654 = vld [vmem:[#allocation2 + $0x20] sm:$0xff]
        %v1655 = vld [vmem:[#allocation2 + $0x28] sm:$0xff]
        %v1656 = vld [vmem:[#allocation2 + $0x30] sm:$0xff]
        %v1657 = vld [vmem:[#allocation2 + $0x38] sm:$0xff]
        %v1658 = vld [vmem:[#allocation2 + $0x40] sm:$0xff]
        %v1659 = vld [vmem:[#allocation2 + $0x48] sm:$0xff]
        %v1660 = vld [vmem:[#allocation2 + $0x50] sm:$0xff]
        %v1661 = vld [vmem:[#allocation2 + $0x58] sm:$0xff]
        %v1662 = vld [vmem:[#allocation2 + $0x60] sm:$0xff]
        %v1663 = vld [vmem:[#allocation2 + $0x68] sm:$0xff]
        %v1664 = vld [vmem:[#allocation2 + $0x70] sm:$0xff]
        %v1665 = vld [vmem:[#allocation2 + $0x78] sm:$0xff]
        %v1666 = vpack.c.bf16 %v1651, %v1650
        %v1667 = vpack.c.bf16 %v1653, %v1652
        %v1668 = vpack.c.bf16 %v1655, %v1654
        %v1669 = vpack.c.bf16 %v1657, %v1656
        %v1670 = vpack.c.bf16 %v1659, %v1658
        %v1671 = vpack.c.bf16 %v1661, %v1660
        %v1672 = vpack.c.bf16 %v1663, %v1662
        %v1673 = vpack.c.bf16 %v1665, %v1664
        %s1674 = sld [smem:[#allocation3]]
        %v1675 = vld [vmem:[%s367] sm:$0xff]
        %v1676 = vld [vmem:[%s367 + $0x8] sm:$0xff]
        %v1677 = vld [vmem:[%s367 + $0x10] sm:$0xff]
        %v1678 = vld [vmem:[%s367 + $0x18] sm:$0xff]
        %v1679 = vld [vmem:[%s367 + $0x20] sm:$0xff]
        %v1680 = vld [vmem:[%s367 + $0x28] sm:$0xff]
        %v1681 = vld [vmem:[%s367 + $0x30] sm:$0xff]
        %v1682 = vld [vmem:[%s367 + $0x38] sm:$0xff]
        %v1683 = vld [vmem:[%s367 + $0x40] sm:$0xff]
        %v1684 = vld [vmem:[%s367 + $0x48] sm:$0xff]
        %v1685 = vld [vmem:[%s367 + $0x50] sm:$0xff]
        %v1686 = vld [vmem:[%s367 + $0x58] sm:$0xff]
        %v1687 = vld [vmem:[%s367 + $0x60] sm:$0xff]
        %v1688 = vld [vmem:[%s367 + $0x68] sm:$0xff]
        %v1689 = vld [vmem:[%s367 + $0x70] sm:$0xff]
        %v1690 = vld [vmem:[%s367 + $0x78] sm:$0xff]
        %v1691 = vstv %s1674
        %v1692 = vmul.f32 %v1691, %v1675
        %v1693 = vmul.f32 %v1691, %v1676
        %v1694 = vmul.f32 %v1691, %v1677
        %v1695 = vmul.f32 %v1691, %v1678
        %v1696 = vmul.f32 %v1691, %v1679
        %v1697 = vmul.f32 %v1691, %v1680
        %v1698 = vmul.f32 %v1691, %v1681
        %v1699 = vmul.f32 %v1691, %v1682
        %v1700 = vmul.f32 %v1691, %v1683
        %v1701 = vmul.f32 %v1691, %v1684
        %v1702 = vmul.f32 %v1691, %v1685
        %v1703 = vmul.f32 %v1691, %v1686
        %v1704 = vmul.f32 %v1691, %v1687
        %v1705 = vmul.f32 %v1691, %v1688
        %v1706 = vmul.f32 %v1691, %v1689
        %v1707 = vmul.f32 %v1691, %v1690
        %1709 = vset.pattern.permute.xlu0 0
        %1710 = vperm.xlu0 %1709, %v1692
        %v1711 = vpop.permute.xlu0 %1710
        %1714 = vset.pattern.permute.xlu0 0
        %1715 = vperm.xlu0 %1714, %v1693
        %v1716 = vpop.permute.xlu0 %1715
        %1719 = vset.pattern.permute.xlu0 0
        %1720 = vperm.xlu0 %1719, %v1694
        %v1721 = vpop.permute.xlu0 %1720
        %1724 = vset.pattern.permute.xlu0 0
        %1725 = vperm.xlu0 %1724, %v1695
        %v1726 = vpop.permute.xlu0 %1725
        %1729 = vset.pattern.permute.xlu0 0
        %1730 = vperm.xlu0 %1729, %v1696
        %v1731 = vpop.permute.xlu0 %1730
        %1734 = vset.pattern.permute.xlu0 0
        %1735 = vperm.xlu0 %1734, %v1697
        %v1736 = vpop.permute.xlu0 %1735
        %1739 = vset.pattern.permute.xlu0 0
        %1740 = vperm.xlu0 %1739, %v1698
        %v1741 = vpop.permute.xlu0 %1740
        %1744 = vset.pattern.permute.xlu0 0
        %1745 = vperm.xlu0 %1744, %v1699
        %v1746 = vpop.permute.xlu0 %1745
        %1749 = vset.pattern.permute.xlu0 0
        %1750 = vperm.xlu0 %1749, %v1700
        %v1751 = vpop.permute.xlu0 %1750
        %1754 = vset.pattern.permute.xlu0 0
        %1755 = vperm.xlu0 %1754, %v1701
        %v1756 = vpop.permute.xlu0 %1755
        %1759 = vset.pattern.permute.xlu0 0
        %1760 = vperm.xlu0 %1759, %v1702
        %v1761 = vpop.permute.xlu0 %1760
        %1764 = vset.pattern.permute.xlu0 0
        %1765 = vperm.xlu0 %1764, %v1703
        %v1766 = vpop.permute.xlu0 %1765
        %1769 = vset.pattern.permute.xlu0 0
        %1770 = vperm.xlu0 %1769, %v1704
        %v1771 = vpop.permute.xlu0 %1770
        %1774 = vset.pattern.permute.xlu0 0
        %1775 = vperm.xlu0 %1774, %v1705
        %v1776 = vpop.permute.xlu0 %1775
        %1779 = vset.pattern.permute.xlu0 0
        %1780 = vperm.xlu0 %1779, %v1706
        %v1781 = vpop.permute.xlu0 %1780
        %1784 = vset.pattern.permute.xlu0 0
        %1785 = vperm.xlu0 %1784, %v1707
        %v1786 = vpop.permute.xlu0 %1785
        %vm1788 = vcmask 293888
        %v1790 = vsel %vm1788, %v1666, 0
        %v1793 = vsel %vm1788, %v1667, 0
        %v1796 = vsel %vm1788, %v1668, 0
        %v1799 = vsel %vm1788, %v1669, 0
        %v1802 = vsel %vm1788, %v1670, 0
        %v1805 = vsel %vm1788, %v1671, 0
        %v1808 = vsel %vm1788, %v1672, 0
        %v1811 = vsel %vm1788, %v1673, 0
        %vm1813 = vcmask 1041408
        %v1815 = vsel %vm1813, %v483, 0
        %1817 = vmatprep.subr.bf16.mxu0 0
        %1818 = vmatpush1.bf16.msra.mxu0 0
        %1819 = vmatprep.subr.bf16.mxu0 0
        %1820 = vmatpush1.bf16.msra.mxu0 0
        %1821 = vmatprep.subr.bf16.mxu0 0
        %1822 = vmatpush1.bf16.msra.mxu0 0
        %1823 = vmatprep.subr.bf16.mxu0 0
        %1824 = vmatpush1.bf16.msra.mxu0 0
        %1825 = vmatprep.subr.bf16.mxu0 0
        %1826 = vmatpush1.bf16.msra.mxu0 0
        %1827 = vmatprep.subr.bf16.mxu0 0
        %1828 = vmatpush1.bf16.msra.mxu0 %v1815
        %1829 = vmatprep.subr.bf16.mxu0 0
        %1830 = vmatpush1.bf16.msra.mxu0 %v482
        %1831 = vmatprep.subr.bf16.mxu0 0
        %1832 = vmatpush1.bf16.msra.mxu0 %v481
        %1833 = vmatprep.subr.bf16.mxu0 0
        %1834 = vmatpush2.bf16.msra.mxu0 0
        %1835 = vmatprep.subr.bf16.mxu0 0
        %1836 = vmatpush2.bf16.msra.mxu0 0
        %1837 = vmatprep.subr.bf16.mxu0 0
        %1838 = vmatpush2.bf16.msra.mxu0 0
        %1839 = vmatprep.subr.bf16.mxu0 0
        %1840 = vmatpush2.bf16.msra.mxu0 0
        %1841 = vmatprep.subr.bf16.mxu0 0
        %1842 = vmatpush2.bf16.msra.mxu0 0
        %1843 = vmatprep.subr.bf16.mxu0 0
        %1844 = vmatpush2.bf16.msra.mxu0 0
        %1845 = vmatprep.subr.bf16.mxu0 0
        %1846 = vmatpush2.bf16.msra.mxu0 0
        %1847 = vmatprep.subr.bf16.mxu0 0
        %1848 = vmatpush2.bf16.msra.mxu0 0
        %1849 = vmatprep.mubr.bf16.mxu0 0
        %1850 = vmatmul.mubr.bf16.gmra.mxu0 %v1790
        %v1851 = vpop.f32.mrf.mxu0
        %v1852 = vadd.f32 %v1711, %v1851
        %v1853 = vpop.f32.mrf.mxu0
        %v1854 = vpop.f32.mrf.mxu0
        %v1855 = vadd.f32 %v1716, %v1854
        %v1856 = vpop.f32.mrf.mxu0
        %1857 = vmatprep.mubr.bf16.mxu0 0
        %1858 = vmatmul.mubr.bf16.gmra.mxu0 %v1793
        %v1859 = vpop.f32.mrf.mxu0
        %v1860 = vadd.f32 %v1721, %v1859
        %v1861 = vpop.f32.mrf.mxu0
        %v1862 = vpop.f32.mrf.mxu0
        %v1863 = vadd.f32 %v1726, %v1862
        %v1864 = vpop.f32.mrf.mxu0
        %1865 = vmatprep.mubr.bf16.mxu0 0
        %1866 = vmatmul.mubr.bf16.gmra.mxu0 %v1796
        %v1867 = vpop.f32.mrf.mxu0
        %v1868 = vadd.f32 %v1731, %v1867
        %v1869 = vpop.f32.mrf.mxu0
        %v1870 = vpop.f32.mrf.mxu0
        %v1871 = vadd.f32 %v1736, %v1870
        %v1872 = vpop.f32.mrf.mxu0
        %1873 = vmatprep.mubr.bf16.mxu0 0
        %1874 = vmatmul.mubr.bf16.gmra.mxu0 %v1799
        %v1875 = vpop.f32.mrf.mxu0
        %v1876 = vadd.f32 %v1741, %v1875
        %v1877 = vpop.f32.mrf.mxu0
        %v1878 = vpop.f32.mrf.mxu0
        %v1879 = vadd.f32 %v1746, %v1878
        %v1880 = vpop.f32.mrf.mxu0
        %1881 = vmatprep.mubr.bf16.mxu0 0
        %1882 = vmatmul.mubr.bf16.gmra.mxu0 %v1802
        %v1883 = vpop.f32.mrf.mxu0
        %v1884 = vadd.f32 %v1751, %v1883
        %v1885 = vpop.f32.mrf.mxu0
        %v1886 = vpop.f32.mrf.mxu0
        %v1887 = vadd.f32 %v1756, %v1886
        %v1888 = vpop.f32.mrf.mxu0
        %1889 = vmatprep.mubr.bf16.mxu0 0
        %1890 = vmatmul.mubr.bf16.gmra.mxu0 %v1805
        %v1891 = vpop.f32.mrf.mxu0
        %v1892 = vadd.f32 %v1761, %v1891
        %v1893 = vpop.f32.mrf.mxu0
        %v1894 = vpop.f32.mrf.mxu0
        %v1895 = vadd.f32 %v1766, %v1894
        %v1896 = vpop.f32.mrf.mxu0
        %1897 = vmatprep.mubr.bf16.mxu0 0
        %1898 = vmatmul.mubr.bf16.gmra.mxu0 %v1808
        %v1899 = vpop.f32.mrf.mxu0
        %v1900 = vadd.f32 %v1771, %v1899
        %v1901 = vpop.f32.mrf.mxu0
        %v1902 = vpop.f32.mrf.mxu0
        %v1903 = vadd.f32 %v1776, %v1902
        %v1904 = vpop.f32.mrf.mxu0
        %1905 = vmatprep.mubr.bf16.mxu0 0
        %1906 = vmatmul.mubr.bf16.gmra.mxu0 %v1811
        %v1907 = vpop.f32.mrf.mxu0
        %v1908 = vadd.f32 %v1781, %v1907
        %v1909 = vpop.f32.mrf.mxu0
        %v1910 = vpop.f32.mrf.mxu0
        %v1911 = vadd.f32 %v1786, %v1910
        %v1912 = vpop.f32.mrf.mxu0
        %1913 = vdwg.mxu0
        %v1914 = vld [vmem:[%s6] sm:$0x1]
        %v1916 = vlaneseq
        %v1917 = vshrl.u32 %v1916, 7
        %v1918 = vsub.s32 0, %v1917
        %v1919 = vrot.slane %v1914, %v1918
        %v1921 = vadd.f32 %v1852, %v1919
        %v1922 = vadd.f32 %v1855, %v1919
        %v1923 = vadd.f32 %v1860, %v1919
        %v1924 = vadd.f32 %v1863, %v1919
        %v1925 = vadd.f32 %v1868, %v1919
        %v1926 = vadd.f32 %v1871, %v1919
        %v1927 = vadd.f32 %v1876, %v1919
        %v1928 = vadd.f32 %v1879, %v1919
        %v1929 = vadd.f32 %v1884, %v1919
        %v1930 = vadd.f32 %v1887, %v1919
        %v1931 = vadd.f32 %v1892, %v1919
        %v1932 = vadd.f32 %v1895, %v1919
        %v1933 = vadd.f32 %v1900, %v1919
        %v1934 = vadd.f32 %v1903, %v1919
        %v1935 = vadd.f32 %v1908, %v1919
        %v1936 = vadd.f32 %v1911, %v1919
        %vm1937 = vcmp.ge.f32.partialorder %v1921, 0.0
        %vm1938 = vcmp.ge.f32.partialorder %v1922, 0.0
        %vm1939 = vcmp.ge.f32.partialorder %v1923, 0.0
        %vm1940 = vcmp.ge.f32.partialorder %v1924, 0.0
        %vm1941 = vcmp.ge.f32.partialorder %v1925, 0.0
        %vm1942 = vcmp.ge.f32.partialorder %v1926, 0.0
        %vm1943 = vcmp.ge.f32.partialorder %v1927, 0.0
        %vm1944 = vcmp.ge.f32.partialorder %v1928, 0.0
        %vm1945 = vcmp.ge.f32.partialorder %v1929, 0.0
        %vm1946 = vcmp.ge.f32.partialorder %v1930, 0.0
        %vm1947 = vcmp.ge.f32.partialorder %v1931, 0.0
        %vm1948 = vcmp.ge.f32.partialorder %v1932, 0.0
        %vm1949 = vcmp.ge.f32.partialorder %v1933, 0.0
        %vm1950 = vcmp.ge.f32.partialorder %v1934, 0.0
        %vm1951 = vcmp.ge.f32.partialorder %v1935, 0.0
        %vm1952 = vcmp.ge.f32.partialorder %v1936, 0.0
        %v1953 = vmul.f32 %v1921, 0.2
        %v1954 = vmul.f32 %v1922, 0.2
        %v1955 = vmul.f32 %v1923, 0.2
        %v1956 = vmul.f32 %v1924, 0.2
        %v1957 = vmul.f32 %v1925, 0.2
        %v1958 = vmul.f32 %v1926, 0.2
        %v1959 = vmul.f32 %v1927, 0.2
        %v1960 = vmul.f32 %v1928, 0.2
        %v1961 = vmul.f32 %v1929, 0.2
        %v1962 = vmul.f32 %v1930, 0.2
        %v1963 = vmul.f32 %v1931, 0.2
        %v1964 = vmul.f32 %v1932, 0.2
        %v1965 = vmul.f32 %v1933, 0.2
        %v1966 = vmul.f32 %v1934, 0.2
        %v1967 = vmul.f32 %v1935, 0.2
        %v1968 = vmul.f32 %v1936, 0.2
        %v1969 = vsel %vm1937, %v1921, %v1953
        %v1970 = vsel %vm1938, %v1922, %v1954
        %v1971 = vsel %vm1939, %v1923, %v1955
        %v1972 = vsel %vm1940, %v1924, %v1956
        %v1973 = vsel %vm1941, %v1925, %v1957
        %v1974 = vsel %vm1942, %v1926, %v1958
        %v1975 = vsel %vm1943, %v1927, %v1959
        %v1976 = vsel %vm1944, %v1928, %v1960
        %v1977 = vsel %vm1945, %v1929, %v1961
        %v1978 = vsel %vm1946, %v1930, %v1962
        %v1979 = vsel %vm1947, %v1931, %v1963
        %v1980 = vsel %vm1948, %v1932, %v1964
        %v1981 = vsel %vm1949, %v1933, %v1965
        %v1982 = vsel %vm1950, %v1934, %v1966
        %v1983 = vsel %vm1951, %v1935, %v1967
        %v1984 = vsel %vm1952, %v1936, %v1968
        %v1985 = vmul.f32 %v1969, 1.4142135
        %v1986 = vmul.f32 %v1970, 1.4142135
        %v1987 = vmul.f32 %v1971, 1.4142135
        %v1988 = vmul.f32 %v1972, 1.4142135
        %v1989 = vmul.f32 %v1973, 1.4142135
        %v1990 = vmul.f32 %v1974, 1.4142135
        %v1991 = vmul.f32 %v1975, 1.4142135
        %v1992 = vmul.f32 %v1976, 1.4142135
        %v1993 = vmul.f32 %v1977, 1.4142135
        %v1994 = vmul.f32 %v1978, 1.4142135
        %v1995 = vmul.f32 %v1979, 1.4142135
        %v1996 = vmul.f32 %v1980, 1.4142135
        %v1997 = vmul.f32 %v1981, 1.4142135
        %v1998 = vmul.f32 %v1982, 1.4142135
        %v1999 = vmul.f32 %v1983, 1.4142135
        %v2000 = vmul.f32 %v1984, 1.4142135
        %2001 = vst [vmem:[%s350] sm:$0xff] %v1985
        %2002 = vst [vmem:[%s350 + $0x8] sm:$0xff] %v1986
        %2003 = vst [vmem:[%s350 + $0x10] sm:$0xff] %v1987
        %2004 = vst [vmem:[%s350 + $0x18] sm:$0xff] %v1988
        %2005 = vst [vmem:[%s350 + $0x20] sm:$0xff] %v1989
        %2006 = vst [vmem:[%s350 + $0x28] sm:$0xff] %v1990
        %2007 = vst [vmem:[%s350 + $0x30] sm:$0xff] %v1991
        %2008 = vst [vmem:[%s350 + $0x38] sm:$0xff] %v1992
        %2009 = vst [vmem:[%s350 + $0x40] sm:$0xff] %v1993
        %2010 = vst [vmem:[%s350 + $0x48] sm:$0xff] %v1994
        %2011 = vst [vmem:[%s350 + $0x50] sm:$0xff] %v1995
        %2012 = vst [vmem:[%s350 + $0x58] sm:$0xff] %v1996
        %2013 = vst [vmem:[%s350 + $0x60] sm:$0xff] %v1997
        %2014 = vst [vmem:[%s350 + $0x68] sm:$0xff] %v1998
        %2015 = vst [vmem:[%s350 + $0x70] sm:$0xff] %v1999
        %2016 = vst [vmem:[%s350 + $0x78] sm:$0xff] %v2000
        %s2017 = sand.u32 %s230, 1
        %s2018 = scalar_lea.sflag [#allocation5], %s2017
        %s2019 = sand.u32 %s230, 1
        %s2020 = smul.addr %s2019, 128
        %s2021 = scalar_lea.vmem [#allocation4], %s2020
        // Predicated region
        $region53: #{tpu_custom_call.1} parent=51 // pred_check
          %p2022 = pneg %p240
        $region54: #{tpu_custom_call.1} parent=51 // pred_check_branch
          %2024 = sbr.rel (%p2022) target = $region56
        $region55: #{tpu_custom_call.1} parent=51 // pred_region
          %s2025 = smul.u32 16, %s28
          %s2027 = ssub.s32 2048, 2048
          %2028 = vsyncadd %s2018, %s2027
          %s2029 = smul.addr %s27, 32
          %s2030 = sadd.s32 %s2025, %s2029
          %s2031 = smul.addr %s2030, 128
          %s2032 = scalar_lea.hbm %s8, %s2031
          %s2033 = sshll.u32 %s2021, 4
          %s2034 = int_to_ptr.vmem [resolvable:$true] %s2033
          %2039 = dma.vmem_to_hbm [thread:$0]  %s2034, 2048, %s2032, %s2018, 128, 128, 8
        $region56: #{tpu_custom_call.1} parent=51 // pred_fallthru
          _
      $region52: #{tpu_custom_call.1} parent=5 // pred_fallthru
        _
      %p2040 = scmp.le.s32.totalorder 2, %s18
      // Predicated region
      $region57: #{tpu_custom_call.1} parent=5 // pred_check
        %p2041 = pneg %p2040
      $region58: #{tpu_custom_call.1} parent=5 // pred_check_branch
        %2043 = sbr.rel (%p2041) target = $region60
      $region59: #{tpu_custom_call.1} parent=5 // pred_region
        %s2044 = ssub.s32 %s18, 2
        // Predicated region
        $region61: #{tpu_custom_call.1} parent=59 // pred_check
          %p2045 = pneg %p246
        $region62: #{tpu_custom_call.1} parent=59 // pred_check_branch
          %2047 = sbr.rel (%p2045) target = $region64
        $region63: #{tpu_custom_call.1} parent=59 // pred_region
          %s2048 = sand.u32 %s231, 1
          %s2049 = scalar_lea.sflag [#allocation5], %s2048
          %s2050 = sand.u32 %s231, 1
          %s2051 = smul.addr %s2050, 128
          %s2052 = scalar_lea.vmem [#allocation4], %s2051
          %2053 = dma.done %s2049, 2048
        $region64: #{tpu_custom_call.1} parent=59 // pred_fallthru
          _
      $region60: #{tpu_custom_call.1} parent=5 // pred_fallthru
        _
    $region6: #{tpu_custom_call.1} parent=1 // loop_footer
      %s22 = sadd.s32 1, %s18
    $region7: #{tpu_custom_call.1} parent=1 // loop_footer_branch
      %17 = sbr.rel target = $region3
    $region8: #{tpu_custom_call.1} parent=1 // loop_exit
      _
    %2054 = vsyncpa [#allocation5], 1
    %s2055 = scalar_lea.sflag [#allocation5], 1
    %2056 = vsyncpa %s2055, 1

</llo_original>
